<compile_context>
chip_gen: v7x
topology: tpu7x:2x2x1
jax: 0.10.0
libtpu: 0.0.40
codegen_flags: <defaults>
</compile_context>

<pallas_src>
import functools
import math

import jax
import jax.numpy as jnp
from jax.experimental import pallas as pl
from jax.experimental.pallas import tpu as pltpu


def embed_gather_kernel(ids_ref, table_hbm, out_ref, row_buf, sems, *, scale, tb):
    # ids_ref:   (n_pad,)          int32  scalar-prefetched token ids (SMEM)
    # table_hbm: (vocab, d_model)  f32    embedding table, left in HBM (pl.ANY)
    # out_ref:   (tb, d_model)     f32    output tile (VMEM, auto-pipelined)
    # row_buf:   (tb, d_model)     f32    VMEM gather scratch
    # sems:      (tb,)                    one DMA semaphore per in-flight row copy
    base = pl.program_id(0) * tb

    # Issue all row gathers for this tile (scattered rows => one DMA per row),
    # then wait on them.  Static unroll: tb is a compile-time constant.
    for t in range(tb):
        idx = ids_ref[base + t]
        pltpu.make_async_copy(
            table_hbm.at[pl.ds(idx, 1)],      # (1, d_model) row in HBM
            row_buf.at[pl.ds(t, 1)],          # (1, d_model) slot in VMEM
            sems.at[t],
        ).start()
    for t in range(tb):
        # Wait only needs shape-matching descriptors (see paged-attention pattern).
        pltpu.make_async_copy(
            table_hbm.at[pl.ds(0, 1)],
            row_buf.at[pl.ds(t, 1)],
            sems.at[t],
        ).wait()

    # sqrt(d_model) scale on the VPU; one dense (tb, d_model) store.
    out_ref[...] = row_buf[...] * scale


def embedder_forward(x, table, *, tb=16):
    """x: (B, S) int token ids; table: (vocab, d_model) f32 -> (B, S, d_model).

    tb = tokens gathered per grid step.  For production-sized inputs raise tb
    (e.g. 64-128) to amortize per-step overhead; each extra token costs one
    more in-flight row DMA + semaphore.
    """
    B, S = x.shape
    vocab, d_model = table.shape
    n = B * S

    # Pad the token count to a tile multiple instead of asserting divisibility.
    n_pad = pl.cdiv(n, tb) * tb
    ids = jnp.clip(x.reshape(n).astype(jnp.int32), 0, vocab - 1)  # keep DMAs in-bounds
    ids = jnp.pad(ids, (0, n_pad - n))                            # pad ids gather id 0

    scale = math.sqrt(d_model)
    kernel = functools.partial(embed_gather_kernel, scale=scale, tb=tb)

    out = pl.pallas_call(
        kernel,
        out_shape=jax.ShapeDtypeStruct((n_pad, d_model), jnp.float32),
        grid_spec=pltpu.PrefetchScalarGridSpec(
            num_scalar_prefetch=1,                          # ids -> SMEM
            grid=(n_pad // tb,),
            in_specs=[pl.BlockSpec(memory_space=pl.ANY)],   # table stays in HBM
            out_specs=pl.BlockSpec((tb, d_model), lambda i, ids: (i, 0)),
            scratch_shapes=[
                pltpu.VMEM((tb, d_model), jnp.float32),     # gathered rows
                pltpu.SemaphoreType.DMA((tb,)),             # per-row copy sems
            ],
        ),
        compiler_params=pltpu.CompilerParams(
            dimension_semantics=("parallel",),              # token tiles are independent
        ),
    )(ids, table)

    return out[:n].reshape(B, S, d_model)


if __name__ == "__main__":
    # Small shapes consistent with the module: batch=2, seq=8, d_model=32, vocab=64.
    B, S, d_model, vocab_size = 2, 8, 32, 64

    key = jax.random.PRNGKey(0)
    k_table, k_ids = jax.random.split(key)

    # nn.Embedding default init: weight ~ N(0, 1)
    table = jax.random.normal(k_table, (vocab_size, d_model), dtype=jnp.float32)
    x = jax.random.randint(k_ids, (B, S), 0, vocab_size, dtype=jnp.int32)

    out = embedder_forward(x, table)
    out = jax.block_until_ready(out)

    # Pure-JAX reference: embedding lookup * sqrt(d_model)
    ref = jnp.take(table, x, axis=0) * math.sqrt(d_model)
    assert out.shape == (B, S, d_model)
    assert jnp.allclose(out, ref, atol=1e-5, rtol=1e-5)

    print("KERNEL_OK")
</pallas_src>

<mosaic_0001>
module attributes {stable_mosaic.version = 11 : i64} {
  func.func @embed_gather_kernel(%arg0: i32, %arg1: memref<16xi32, #tpu.memory_space<smem>>, %arg2: memref<64x32xf32, #tpu.memory_space<any>>, %arg3: memref<16x32xf32, #tpu.memory_space<vmem>>, %arg4: memref<16x32xf32, #tpu.memory_space<vmem>>, %arg5: memref<16x!tpu.dma_semaphore, #tpu.memory_space<semaphore_mem>>) attributes {dimension_semantics = [#tpu.dimension_semantics<parallel>], iteration_bounds = array<i64: 1>, scalar_prefetch = 1 : i64, scratch_operands = 2 : i64, tpu.core_type = #tpu.core_type<tc>, window_params = [{}, {transform_indices = @transform_1, window_bounds = array<i64: 16, 32>}]} {
    %c16_i32 = arith.constant 16 : i32
    %0 = arith.muli %arg0, %c16_i32 : i32
    %c0_i32 = arith.constant 0 : i32
    %1 = arith.addi %0, %c0_i32 : i32
    %2 = arith.index_cast %1 : i32 to index
    %3 = memref.load %arg1[%2] : memref<16xi32, #tpu.memory_space<smem>>
    %c0_i32_0 = arith.constant 0 : i32
    %c0_i32_1 = arith.constant 0 : i32
    %4 = tpu.memref_slice %arg2[%3, %c0_i32_1] : memref<64x32xf32, #tpu.memory_space<any>> -> memref<1x32xf32, #tpu.memory_space<any>>
    %c0_i32_2 = arith.constant 0 : i32
    %c0_i32_3 = arith.constant 0 : i32
    %5 = tpu.memref_slice %arg4[%c0_i32_2, %c0_i32_3] : memref<16x32xf32, #tpu.memory_space<vmem>> -> memref<1x32xf32, #tpu.memory_space<vmem>>
    %6 = tpu.memref_slice %arg5[%c0_i32_0] : memref<16x!tpu.dma_semaphore, #tpu.memory_space<semaphore_mem>> -> memref<1x!tpu.dma_semaphore, #tpu.memory_space<semaphore_mem>>
    %7 = tpu.memref_squeeze %6 : memref<1x!tpu.dma_semaphore, #tpu.memory_space<semaphore_mem>> -> memref<!tpu.dma_semaphore, #tpu.memory_space<semaphore_mem>>
    tpu.enqueue_dma source(%4 : memref<1x32xf32, #tpu.memory_space<any>>) target(%5 : memref<1x32xf32, #tpu.memory_space<vmem>>) target_semaphore(%7 : memref<!tpu.dma_semaphore, #tpu.memory_space<semaphore_mem>>)
    %c1_i32 = arith.constant 1 : i32
    %8 = arith.addi %0, %c1_i32 : i32
    %9 = arith.index_cast %8 : i32 to index
    %10 = memref.load %arg1[%9] : memref<16xi32, #tpu.memory_space<smem>>
    %c1_i32_4 = arith.constant 1 : i32
    %c0_i32_5 = arith.constant 0 : i32
    %11 = tpu.memref_slice %arg2[%10, %c0_i32_5] : memref<64x32xf32, #tpu.memory_space<any>> -> memref<1x32xf32, #tpu.memory_space<any>>
    %c1_i32_6 = arith.constant 1 : i32
    %c0_i32_7 = arith.constant 0 : i32
    %12 = tpu.memref_slice %arg4[%c1_i32_6, %c0_i32_7] : memref<16x32xf32, #tpu.memory_space<vmem>> -> memref<1x32xf32, #tpu.memory_space<vmem>>
    %13 = tpu.memref_slice %arg5[%c1_i32_4] : memref<16x!tpu.dma_semaphore, #tpu.memory_space<semaphore_mem>> -> memref<1x!tpu.dma_semaphore, #tpu.memory_space<semaphore_mem>>
    %14 = tpu.memref_squeeze %13 : memref<1x!tpu.dma_semaphore, #tpu.memory_space<semaphore_mem>> -> memref<!tpu.dma_semaphore, #tpu.memory_space<semaphore_mem>>
    tpu.enqueue_dma source(%11 : memref<1x32xf32, #tpu.memory_space<any>>) target(%12 : memref<1x32xf32, #tpu.memory_space<vmem>>) target_semaphore(%14 : memref<!tpu.dma_semaphore, #tpu.memory_space<semaphore_mem>>)
    %c2_i32 = arith.constant 2 : i32
    %15 = arith.addi %0, %c2_i32 : i32
    %16 = arith.index_cast %15 : i32 to index
    %17 = memref.load %arg1[%16] : memref<16xi32, #tpu.memory_space<smem>>
    %c2_i32_8 = arith.constant 2 : i32
    %c0_i32_9 = arith.constant 0 : i32
    %18 = tpu.memref_slice %arg2[%17, %c0_i32_9] : memref<64x32xf32, #tpu.memory_space<any>> -> memref<1x32xf32, #tpu.memory_space<any>>
    %c2_i32_10 = arith.constant 2 : i32
    %c0_i32_11 = arith.constant 0 : i32
    %19 = tpu.memref_slice %arg4[%c2_i32_10, %c0_i32_11] : memref<16x32xf32, #tpu.memory_space<vmem>> -> memref<1x32xf32, #tpu.memory_space<vmem>>
    %20 = tpu.memref_slice %arg5[%c2_i32_8] : memref<16x!tpu.dma_semaphore, #tpu.memory_space<semaphore_mem>> -> memref<1x!tpu.dma_semaphore, #tpu.memory_space<semaphore_mem>>
    %21 = tpu.memref_squeeze %20 : memref<1x!tpu.dma_semaphore, #tpu.memory_space<semaphore_mem>> -> memref<!tpu.dma_semaphore, #tpu.memory_space<semaphore_mem>>
    tpu.enqueue_dma source(%18 : memref<1x32xf32, #tpu.memory_space<any>>) target(%19 : memref<1x32xf32, #tpu.memory_space<vmem>>) target_semaphore(%21 : memref<!tpu.dma_semaphore, #tpu.memory_space<semaphore_mem>>)
    %c3_i32 = arith.constant 3 : i32
    %22 = arith.addi %0, %c3_i32 : i32
    %23 = arith.index_cast %22 : i32 to index
    %24 = memref.load %arg1[%23] : memref<16xi32, #tpu.memory_space<smem>>
    %c3_i32_12 = arith.constant 3 : i32
    %c0_i32_13 = arith.constant 0 : i32
    %25 = tpu.memref_slice %arg2[%24, %c0_i32_13] : memref<64x32xf32, #tpu.memory_space<any>> -> memref<1x32xf32, #tpu.memory_space<any>>
    %c3_i32_14 = arith.constant 3 : i32
    %c0_i32_15 = arith.constant 0 : i32
    %26 = tpu.memref_slice %arg4[%c3_i32_14, %c0_i32_15] : memref<16x32xf32, #tpu.memory_space<vmem>> -> memref<1x32xf32, #tpu.memory_space<vmem>>
    %27 = tpu.memref_slice %arg5[%c3_i32_12] : memref<16x!tpu.dma_semaphore, #tpu.memory_space<semaphore_mem>> -> memref<1x!tpu.dma_semaphore, #tpu.memory_space<semaphore_mem>>
    %28 = tpu.memref_squeeze %27 : memref<1x!tpu.dma_semaphore, #tpu.memory_space<semaphore_mem>> -> memref<!tpu.dma_semaphore, #tpu.memory_space<semaphore_mem>>
    tpu.enqueue_dma source(%25 : memref<1x32xf32, #tpu.memory_space<any>>) target(%26 : memref<1x32xf32, #tpu.memory_space<vmem>>) target_semaphore(%28 : memref<!tpu.dma_semaphore, #tpu.memory_space<semaphore_mem>>)
    %c4_i32 = arith.constant 4 : i32
    %29 = arith.addi %0, %c4_i32 : i32
    %30 = arith.index_cast %29 : i32 to index
    %31 = memref.load %arg1[%30] : memref<16xi32, #tpu.memory_space<smem>>
    %c4_i32_16 = arith.constant 4 : i32
    %c0_i32_17 = arith.constant 0 : i32
    %32 = tpu.memref_slice %arg2[%31, %c0_i32_17] : memref<64x32xf32, #tpu.memory_space<any>> -> memref<1x32xf32, #tpu.memory_space<any>>
    %c4_i32_18 = arith.constant 4 : i32
    %c0_i32_19 = arith.constant 0 : i32
    %33 = tpu.memref_slice %arg4[%c4_i32_18, %c0_i32_19] : memref<16x32xf32, #tpu.memory_space<vmem>> -> memref<1x32xf32, #tpu.memory_space<vmem>>
    %34 = tpu.memref_slice %arg5[%c4_i32_16] : memref<16x!tpu.dma_semaphore, #tpu.memory_space<semaphore_mem>> -> memref<1x!tpu.dma_semaphore, #tpu.memory_space<semaphore_mem>>
    %35 = tpu.memref_squeeze %34 : memref<1x!tpu.dma_semaphore, #tpu.memory_space<semaphore_mem>> -> memref<!tpu.dma_semaphore, #tpu.memory_space<semaphore_mem>>
    tpu.enqueue_dma source(%32 : memref<1x32xf32, #tpu.memory_space<any>>) target(%33 : memref<1x32xf32, #tpu.memory_space<vmem>>) target_semaphore(%35 : memref<!tpu.dma_semaphore, #tpu.memory_space<semaphore_mem>>)
    %c5_i32 = arith.constant 5 : i32
    %36 = arith.addi %0, %c5_i32 : i32
    %37 = arith.index_cast %36 : i32 to index
    %38 = memref.load %arg1[%37] : memref<16xi32, #tpu.memory_space<smem>>
    %c5_i32_20 = arith.constant 5 : i32
    %c0_i32_21 = arith.constant 0 : i32
    %39 = tpu.memref_slice %arg2[%38, %c0_i32_21] : memref<64x32xf32, #tpu.memory_space<any>> -> memref<1x32xf32, #tpu.memory_space<any>>
    %c5_i32_22 = arith.constant 5 : i32
    %c0_i32_23 = arith.constant 0 : i32
    %40 = tpu.memref_slice %arg4[%c5_i32_22, %c0_i32_23] : memref<16x32xf32, #tpu.memory_space<vmem>> -> memref<1x32xf32, #tpu.memory_space<vmem>>
    %41 = tpu.memref_slice %arg5[%c5_i32_20] : memref<16x!tpu.dma_semaphore, #tpu.memory_space<semaphore_mem>> -> memref<1x!tpu.dma_semaphore, #tpu.memory_space<semaphore_mem>>
    %42 = tpu.memref_squeeze %41 : memref<1x!tpu.dma_semaphore, #tpu.memory_space<semaphore_mem>> -> memref<!tpu.dma_semaphore, #tpu.memory_space<semaphore_mem>>
    tpu.enqueue_dma source(%39 : memref<1x32xf32, #tpu.memory_space<any>>) target(%40 : memref<1x32xf32, #tpu.memory_space<vmem>>) target_semaphore(%42 : memref<!tpu.dma_semaphore, #tpu.memory_space<semaphore_mem>>)
    %c6_i32 = arith.constant 6 : i32
    %43 = arith.addi %0, %c6_i32 : i32
    %44 = arith.index_cast %43 : i32 to index
    %45 = memref.load %arg1[%44] : memref<16xi32, #tpu.memory_space<smem>>
    %c6_i32_24 = arith.constant 6 : i32
    %c0_i32_25 = arith.constant 0 : i32
    %46 = tpu.memref_slice %arg2[%45, %c0_i32_25] : memref<64x32xf32, #tpu.memory_space<any>> -> memref<1x32xf32, #tpu.memory_space<any>>
    %c6_i32_26 = arith.constant 6 : i32
    %c0_i32_27 = arith.constant 0 : i32
    %47 = tpu.memref_slice %arg4[%c6_i32_26, %c0_i32_27] : memref<16x32xf32, #tpu.memory_space<vmem>> -> memref<1x32xf32, #tpu.memory_space<vmem>>
    %48 = tpu.memref_slice %arg5[%c6_i32_24] : memref<16x!tpu.dma_semaphore, #tpu.memory_space<semaphore_mem>> -> memref<1x!tpu.dma_semaphore, #tpu.memory_space<semaphore_mem>>
    %49 = tpu.memref_squeeze %48 : memref<1x!tpu.dma_semaphore, #tpu.memory_space<semaphore_mem>> -> memref<!tpu.dma_semaphore, #tpu.memory_space<semaphore_mem>>
    tpu.enqueue_dma source(%46 : memref<1x32xf32, #tpu.memory_space<any>>) target(%47 : memref<1x32xf32, #tpu.memory_space<vmem>>) target_semaphore(%49 : memref<!tpu.dma_semaphore, #tpu.memory_space<semaphore_mem>>)
    %c7_i32 = arith.constant 7 : i32
    %50 = arith.addi %0, %c7_i32 : i32
    %51 = arith.index_cast %50 : i32 to index
    %52 = memref.load %arg1[%51] : memref<16xi32, #tpu.memory_space<smem>>
    %c7_i32_28 = arith.constant 7 : i32
    %c0_i32_29 = arith.constant 0 : i32
    %53 = tpu.memref_slice %arg2[%52, %c0_i32_29] : memref<64x32xf32, #tpu.memory_space<any>> -> memref<1x32xf32, #tpu.memory_space<any>>
    %c7_i32_30 = arith.constant 7 : i32
    %c0_i32_31 = arith.constant 0 : i32
    %54 = tpu.memref_slice %arg4[%c7_i32_30, %c0_i32_31] : memref<16x32xf32, #tpu.memory_space<vmem>> -> memref<1x32xf32, #tpu.memory_space<vmem>>
    %55 = tpu.memref_slice %arg5[%c7_i32_28] : memref<16x!tpu.dma_semaphore, #tpu.memory_space<semaphore_mem>> -> memref<1x!tpu.dma_semaphore, #tpu.memory_space<semaphore_mem>>
    %56 = tpu.memref_squeeze %55 : memref<1x!tpu.dma_semaphore, #tpu.memory_space<semaphore_mem>> -> memref<!tpu.dma_semaphore, #tpu.memory_space<semaphore_mem>>
    tpu.enqueue_dma source(%53 : memref<1x32xf32, #tpu.memory_space<any>>) target(%54 : memref<1x32xf32, #tpu.memory_space<vmem>>) target_semaphore(%56 : memref<!tpu.dma_semaphore, #tpu.memory_space<semaphore_mem>>)
    %c8_i32 = arith.constant 8 : i32
    %57 = arith.addi %0, %c8_i32 : i32
    %58 = arith.index_cast %57 : i32 to index
    %59 = memref.load %arg1[%58] : memref<16xi32, #tpu.memory_space<smem>>
    %c8_i32_32 = arith.constant 8 : i32
    %c0_i32_33 = arith.constant 0 : i32
    %60 = tpu.memref_slice %arg2[%59, %c0_i32_33] : memref<64x32xf32, #tpu.memory_space<any>> -> memref<1x32xf32, #tpu.memory_space<any>>
    %c8_i32_34 = arith.constant 8 : i32
    %c0_i32_35 = arith.constant 0 : i32
    %61 = tpu.memref_slice %arg4[%c8_i32_34, %c0_i32_35] : memref<16x32xf32, #tpu.memory_space<vmem>> -> memref<1x32xf32, #tpu.memory_space<vmem>>
    %62 = tpu.memref_slice %arg5[%c8_i32_32] : memref<16x!tpu.dma_semaphore, #tpu.memory_space<semaphore_mem>> -> memref<1x!tpu.dma_semaphore, #tpu.memory_space<semaphore_mem>>
    %63 = tpu.memref_squeeze %62 : memref<1x!tpu.dma_semaphore, #tpu.memory_space<semaphore_mem>> -> memref<!tpu.dma_semaphore, #tpu.memory_space<semaphore_mem>>
    tpu.enqueue_dma source(%60 : memref<1x32xf32, #tpu.memory_space<any>>) target(%61 : memref<1x32xf32, #tpu.memory_space<vmem>>) target_semaphore(%63 : memref<!tpu.dma_semaphore, #tpu.memory_space<semaphore_mem>>)
    %c9_i32 = arith.constant 9 : i32
    %64 = arith.addi %0, %c9_i32 : i32
    %65 = arith.index_cast %64 : i32 to index
    %66 = memref.load %arg1[%65] : memref<16xi32, #tpu.memory_space<smem>>
    %c9_i32_36 = arith.constant 9 : i32
    %c0_i32_37 = arith.constant 0 : i32
    %67 = tpu.memref_slice %arg2[%66, %c0_i32_37] : memref<64x32xf32, #tpu.memory_space<any>> -> memref<1x32xf32, #tpu.memory_space<any>>
    %c9_i32_38 = arith.constant 9 : i32
    %c0_i32_39 = arith.constant 0 : i32
    %68 = tpu.memref_slice %arg4[%c9_i32_38, %c0_i32_39] : memref<16x32xf32, #tpu.memory_space<vmem>> -> memref<1x32xf32, #tpu.memory_space<vmem>>
    %69 = tpu.memref_slice %arg5[%c9_i32_36] : memref<16x!tpu.dma_semaphore, #tpu.memory_space<semaphore_mem>> -> memref<1x!tpu.dma_semaphore, #tpu.memory_space<semaphore_mem>>
    %70 = tpu.memref_squeeze %69 : memref<1x!tpu.dma_semaphore, #tpu.memory_space<semaphore_mem>> -> memref<!tpu.dma_semaphore, #tpu.memory_space<semaphore_mem>>
    tpu.enqueue_dma source(%67 : memref<1x32xf32, #tpu.memory_space<any>>) target(%68 : memref<1x32xf32, #tpu.memory_space<vmem>>) target_semaphore(%70 : memref<!tpu.dma_semaphore, #tpu.memory_space<semaphore_mem>>)
    %c10_i32 = arith.constant 10 : i32
    %71 = arith.addi %0, %c10_i32 : i32
    %72 = arith.index_cast %71 : i32 to index
    %73 = memref.load %arg1[%72] : memref<16xi32, #tpu.memory_space<smem>>
    %c10_i32_40 = arith.constant 10 : i32
    %c0_i32_41 = arith.constant 0 : i32
    %74 = tpu.memref_slice %arg2[%73, %c0_i32_41] : memref<64x32xf32, #tpu.memory_space<any>> -> memref<1x32xf32, #tpu.memory_space<any>>
    %c10_i32_42 = arith.constant 10 : i32
    %c0_i32_43 = arith.constant 0 : i32
    %75 = tpu.memref_slice %arg4[%c10_i32_42, %c0_i32_43] : memref<16x32xf32, #tpu.memory_space<vmem>> -> memref<1x32xf32, #tpu.memory_space<vmem>>
    %76 = tpu.memref_slice %arg5[%c10_i32_40] : memref<16x!tpu.dma_semaphore, #tpu.memory_space<semaphore_mem>> -> memref<1x!tpu.dma_semaphore, #tpu.memory_space<semaphore_mem>>
    %77 = tpu.memref_squeeze %76 : memref<1x!tpu.dma_semaphore, #tpu.memory_space<semaphore_mem>> -> memref<!tpu.dma_semaphore, #tpu.memory_space<semaphore_mem>>
    tpu.enqueue_dma source(%74 : memref<1x32xf32, #tpu.memory_space<any>>) target(%75 : memref<1x32xf32, #tpu.memory_space<vmem>>) target_semaphore(%77 : memref<!tpu.dma_semaphore, #tpu.memory_space<semaphore_mem>>)
    %c11_i32 = arith.constant 11 : i32
    %78 = arith.addi %0, %c11_i32 : i32
    %79 = arith.index_cast %78 : i32 to index
    %80 = memref.load %arg1[%79] : memref<16xi32, #tpu.memory_space<smem>>
    %c11_i32_44 = arith.constant 11 : i32
    %c0_i32_45 = arith.constant 0 : i32
    %81 = tpu.memref_slice %arg2[%80, %c0_i32_45] : memref<64x32xf32, #tpu.memory_space<any>> -> memref<1x32xf32, #tpu.memory_space<any>>
    %c11_i32_46 = arith.constant 11 : i32
    %c0_i32_47 = arith.constant 0 : i32
    %82 = tpu.memref_slice %arg4[%c11_i32_46, %c0_i32_47] : memref<16x32xf32, #tpu.memory_space<vmem>> -> memref<1x32xf32, #tpu.memory_space<vmem>>
    %83 = tpu.memref_slice %arg5[%c11_i32_44] : memref<16x!tpu.dma_semaphore, #tpu.memory_space<semaphore_mem>> -> memref<1x!tpu.dma_semaphore, #tpu.memory_space<semaphore_mem>>
    %84 = tpu.memref_squeeze %83 : memref<1x!tpu.dma_semaphore, #tpu.memory_space<semaphore_mem>> -> memref<!tpu.dma_semaphore, #tpu.memory_space<semaphore_mem>>
    tpu.enqueue_dma source(%81 : memref<1x32xf32, #tpu.memory_space<any>>) target(%82 : memref<1x32xf32, #tpu.memory_space<vmem>>) target_semaphore(%84 : memref<!tpu.dma_semaphore, #tpu.memory_space<semaphore_mem>>)
    %c12_i32 = arith.constant 12 : i32
    %85 = arith.addi %0, %c12_i32 : i32
    %86 = arith.index_cast %85 : i32 to index
    %87 = memref.load %arg1[%86] : memref<16xi32, #tpu.memory_space<smem>>
    %c12_i32_48 = arith.constant 12 : i32
    %c0_i32_49 = arith.constant 0 : i32
    %88 = tpu.memref_slice %arg2[%87, %c0_i32_49] : memref<64x32xf32, #tpu.memory_space<any>> -> memref<1x32xf32, #tpu.memory_space<any>>
    %c12_i32_50 = arith.constant 12 : i32
    %c0_i32_51 = arith.constant 0 : i32
    %89 = tpu.memref_slice %arg4[%c12_i32_50, %c0_i32_51] : memref<16x32xf32, #tpu.memory_space<vmem>> -> memref<1x32xf32, #tpu.memory_space<vmem>>
    %90 = tpu.memref_slice %arg5[%c12_i32_48] : memref<16x!tpu.dma_semaphore, #tpu.memory_space<semaphore_mem>> -> memref<1x!tpu.dma_semaphore, #tpu.memory_space<semaphore_mem>>
    %91 = tpu.memref_squeeze %90 : memref<1x!tpu.dma_semaphore, #tpu.memory_space<semaphore_mem>> -> memref<!tpu.dma_semaphore, #tpu.memory_space<semaphore_mem>>
    tpu.enqueue_dma source(%88 : memref<1x32xf32, #tpu.memory_space<any>>) target(%89 : memref<1x32xf32, #tpu.memory_space<vmem>>) target_semaphore(%91 : memref<!tpu.dma_semaphore, #tpu.memory_space<semaphore_mem>>)
    %c13_i32 = arith.constant 13 : i32
    %92 = arith.addi %0, %c13_i32 : i32
    %93 = arith.index_cast %92 : i32 to index
    %94 = memref.load %arg1[%93] : memref<16xi32, #tpu.memory_space<smem>>
    %c13_i32_52 = arith.constant 13 : i32
    %c0_i32_53 = arith.constant 0 : i32
    %95 = tpu.memref_slice %arg2[%94, %c0_i32_53] : memref<64x32xf32, #tpu.memory_space<any>> -> memref<1x32xf32, #tpu.memory_space<any>>
    %c13_i32_54 = arith.constant 13 : i32
    %c0_i32_55 = arith.constant 0 : i32
    %96 = tpu.memref_slice %arg4[%c13_i32_54, %c0_i32_55] : memref<16x32xf32, #tpu.memory_space<vmem>> -> memref<1x32xf32, #tpu.memory_space<vmem>>
    %97 = tpu.memref_slice %arg5[%c13_i32_52] : memref<16x!tpu.dma_semaphore, #tpu.memory_space<semaphore_mem>> -> memref<1x!tpu.dma_semaphore, #tpu.memory_space<semaphore_mem>>
    %98 = tpu.memref_squeeze %97 : memref<1x!tpu.dma_semaphore, #tpu.memory_space<semaphore_mem>> -> memref<!tpu.dma_semaphore, #tpu.memory_space<semaphore_mem>>
    tpu.enqueue_dma source(%95 : memref<1x32xf32, #tpu.memory_space<any>>) target(%96 : memref<1x32xf32, #tpu.memory_space<vmem>>) target_semaphore(%98 : memref<!tpu.dma_semaphore, #tpu.memory_space<semaphore_mem>>)
    %c14_i32 = arith.constant 14 : i32
    %99 = arith.addi %0, %c14_i32 : i32
    %100 = arith.index_cast %99 : i32 to index
    %101 = memref.load %arg1[%100] : memref<16xi32, #tpu.memory_space<smem>>
    %c14_i32_56 = arith.constant 14 : i32
    %c0_i32_57 = arith.constant 0 : i32
    %102 = tpu.memref_slice %arg2[%101, %c0_i32_57] : memref<64x32xf32, #tpu.memory_space<any>> -> memref<1x32xf32, #tpu.memory_space<any>>
    %c14_i32_58 = arith.constant 14 : i32
    %c0_i32_59 = arith.constant 0 : i32
    %103 = tpu.memref_slice %arg4[%c14_i32_58, %c0_i32_59] : memref<16x32xf32, #tpu.memory_space<vmem>> -> memref<1x32xf32, #tpu.memory_space<vmem>>
    %104 = tpu.memref_slice %arg5[%c14_i32_56] : memref<16x!tpu.dma_semaphore, #tpu.memory_space<semaphore_mem>> -> memref<1x!tpu.dma_semaphore, #tpu.memory_space<semaphore_mem>>
    %105 = tpu.memref_squeeze %104 : memref<1x!tpu.dma_semaphore, #tpu.memory_space<semaphore_mem>> -> memref<!tpu.dma_semaphore, #tpu.memory_space<semaphore_mem>>
    tpu.enqueue_dma source(%102 : memref<1x32xf32, #tpu.memory_space<any>>) target(%103 : memref<1x32xf32, #tpu.memory_space<vmem>>) target_semaphore(%105 : memref<!tpu.dma_semaphore, #tpu.memory_space<semaphore_mem>>)
    %c15_i32 = arith.constant 15 : i32
    %106 = arith.addi %0, %c15_i32 : i32
    %107 = arith.index_cast %106 : i32 to index
    %108 = memref.load %arg1[%107] : memref<16xi32, #tpu.memory_space<smem>>
    %c15_i32_60 = arith.constant 15 : i32
    %c0_i32_61 = arith.constant 0 : i32
    %109 = tpu.memref_slice %arg2[%108, %c0_i32_61] : memref<64x32xf32, #tpu.memory_space<any>> -> memref<1x32xf32, #tpu.memory_space<any>>
    %c15_i32_62 = arith.constant 15 : i32
    %c0_i32_63 = arith.constant 0 : i32
    %110 = tpu.memref_slice %arg4[%c15_i32_62, %c0_i32_63] : memref<16x32xf32, #tpu.memory_space<vmem>> -> memref<1x32xf32, #tpu.memory_space<vmem>>
    %111 = tpu.memref_slice %arg5[%c15_i32_60] : memref<16x!tpu.dma_semaphore, #tpu.memory_space<semaphore_mem>> -> memref<1x!tpu.dma_semaphore, #tpu.memory_space<semaphore_mem>>
    %112 = tpu.memref_squeeze %111 : memref<1x!tpu.dma_semaphore, #tpu.memory_space<semaphore_mem>> -> memref<!tpu.dma_semaphore, #tpu.memory_space<semaphore_mem>>
    tpu.enqueue_dma source(%109 : memref<1x32xf32, #tpu.memory_space<any>>) target(%110 : memref<1x32xf32, #tpu.memory_space<vmem>>) target_semaphore(%112 : memref<!tpu.dma_semaphore, #tpu.memory_space<semaphore_mem>>)
    %c0_i32_64 = arith.constant 0 : i32
    %c0_i32_65 = arith.constant 0 : i32
    %c0_i32_66 = arith.constant 0 : i32
    %113 = tpu.memref_slice %arg2[%c0_i32_65, %c0_i32_66] : memref<64x32xf32, #tpu.memory_space<any>> -> memref<1x32xf32, #tpu.memory_space<any>>
    %c0_i32_67 = arith.constant 0 : i32
    %c0_i32_68 = arith.constant 0 : i32
    %114 = tpu.memref_slice %arg4[%c0_i32_67, %c0_i32_68] : memref<16x32xf32, #tpu.memory_space<vmem>> -> memref<1x32xf32, #tpu.memory_space<vmem>>
    %115 = tpu.memref_slice %arg5[%c0_i32_64] : memref<16x!tpu.dma_semaphore, #tpu.memory_space<semaphore_mem>> -> memref<1x!tpu.dma_semaphore, #tpu.memory_space<semaphore_mem>>
    %116 = tpu.memref_squeeze %115 : memref<1x!tpu.dma_semaphore, #tpu.memory_space<semaphore_mem>> -> memref<!tpu.dma_semaphore, #tpu.memory_space<semaphore_mem>>
    tpu.wait_dma2 semaphore(%116 : memref<!tpu.dma_semaphore, #tpu.memory_space<semaphore_mem>>) src(%113 : memref<1x32xf32, #tpu.memory_space<any>>) dst(%114 : memref<1x32xf32, #tpu.memory_space<vmem>>)
    %c1_i32_69 = arith.constant 1 : i32
    %c0_i32_70 = arith.constant 0 : i32
    %c0_i32_71 = arith.constant 0 : i32
    %117 = tpu.memref_slice %arg2[%c0_i32_70, %c0_i32_71] : memref<64x32xf32, #tpu.memory_space<any>> -> memref<1x32xf32, #tpu.memory_space<any>>
    %c1_i32_72 = arith.constant 1 : i32
    %c0_i32_73 = arith.constant 0 : i32
    %118 = tpu.memref_slice %arg4[%c1_i32_72, %c0_i32_73] : memref<16x32xf32, #tpu.memory_space<vmem>> -> memref<1x32xf32, #tpu.memory_space<vmem>>
    %119 = tpu.memref_slice %arg5[%c1_i32_69] : memref<16x!tpu.dma_semaphore, #tpu.memory_space<semaphore_mem>> -> memref<1x!tpu.dma_semaphore, #tpu.memory_space<semaphore_mem>>
    %120 = tpu.memref_squeeze %119 : memref<1x!tpu.dma_semaphore, #tpu.memory_space<semaphore_mem>> -> memref<!tpu.dma_semaphore, #tpu.memory_space<semaphore_mem>>
    tpu.wait_dma2 semaphore(%120 : memref<!tpu.dma_semaphore, #tpu.memory_space<semaphore_mem>>) src(%117 : memref<1x32xf32, #tpu.memory_space<any>>) dst(%118 : memref<1x32xf32, #tpu.memory_space<vmem>>)
    %c2_i32_74 = arith.constant 2 : i32
    %c0_i32_75 = arith.constant 0 : i32
    %c0_i32_76 = arith.constant 0 : i32
    %121 = tpu.memref_slice %arg2[%c0_i32_75, %c0_i32_76] : memref<64x32xf32, #tpu.memory_space<any>> -> memref<1x32xf32, #tpu.memory_space<any>>
    %c2_i32_77 = arith.constant 2 : i32
    %c0_i32_78 = arith.constant 0 : i32
    %122 = tpu.memref_slice %arg4[%c2_i32_77, %c0_i32_78] : memref<16x32xf32, #tpu.memory_space<vmem>> -> memref<1x32xf32, #tpu.memory_space<vmem>>
    %123 = tpu.memref_slice %arg5[%c2_i32_74] : memref<16x!tpu.dma_semaphore, #tpu.memory_space<semaphore_mem>> -> memref<1x!tpu.dma_semaphore, #tpu.memory_space<semaphore_mem>>
    %124 = tpu.memref_squeeze %123 : memref<1x!tpu.dma_semaphore, #tpu.memory_space<semaphore_mem>> -> memref<!tpu.dma_semaphore, #tpu.memory_space<semaphore_mem>>
    tpu.wait_dma2 semaphore(%124 : memref<!tpu.dma_semaphore, #tpu.memory_space<semaphore_mem>>) src(%121 : memref<1x32xf32, #tpu.memory_space<any>>) dst(%122 : memref<1x32xf32, #tpu.memory_space<vmem>>)
    %c3_i32_79 = arith.constant 3 : i32
    %c0_i32_80 = arith.constant 0 : i32
    %c0_i32_81 = arith.constant 0 : i32
    %125 = tpu.memref_slice %arg2[%c0_i32_80, %c0_i32_81] : memref<64x32xf32, #tpu.memory_space<any>> -> memref<1x32xf32, #tpu.memory_space<any>>
    %c3_i32_82 = arith.constant 3 : i32
    %c0_i32_83 = arith.constant 0 : i32
    %126 = tpu.memref_slice %arg4[%c3_i32_82, %c0_i32_83] : memref<16x32xf32, #tpu.memory_space<vmem>> -> memref<1x32xf32, #tpu.memory_space<vmem>>
    %127 = tpu.memref_slice %arg5[%c3_i32_79] : memref<16x!tpu.dma_semaphore, #tpu.memory_space<semaphore_mem>> -> memref<1x!tpu.dma_semaphore, #tpu.memory_space<semaphore_mem>>
    %128 = tpu.memref_squeeze %127 : memref<1x!tpu.dma_semaphore, #tpu.memory_space<semaphore_mem>> -> memref<!tpu.dma_semaphore, #tpu.memory_space<semaphore_mem>>
    tpu.wait_dma2 semaphore(%128 : memref<!tpu.dma_semaphore, #tpu.memory_space<semaphore_mem>>) src(%125 : memref<1x32xf32, #tpu.memory_space<any>>) dst(%126 : memref<1x32xf32, #tpu.memory_space<vmem>>)
    %c4_i32_84 = arith.constant 4 : i32
    %c0_i32_85 = arith.constant 0 : i32
    %c0_i32_86 = arith.constant 0 : i32
    %129 = tpu.memref_slice %arg2[%c0_i32_85, %c0_i32_86] : memref<64x32xf32, #tpu.memory_space<any>> -> memref<1x32xf32, #tpu.memory_space<any>>
    %c4_i32_87 = arith.constant 4 : i32
    %c0_i32_88 = arith.constant 0 : i32
    %130 = tpu.memref_slice %arg4[%c4_i32_87, %c0_i32_88] : memref<16x32xf32, #tpu.memory_space<vmem>> -> memref<1x32xf32, #tpu.memory_space<vmem>>
    %131 = tpu.memref_slice %arg5[%c4_i32_84] : memref<16x!tpu.dma_semaphore, #tpu.memory_space<semaphore_mem>> -> memref<1x!tpu.dma_semaphore, #tpu.memory_space<semaphore_mem>>
    %132 = tpu.memref_squeeze %131 : memref<1x!tpu.dma_semaphore, #tpu.memory_space<semaphore_mem>> -> memref<!tpu.dma_semaphore, #tpu.memory_space<semaphore_mem>>
    tpu.wait_dma2 semaphore(%132 : memref<!tpu.dma_semaphore, #tpu.memory_space<semaphore_mem>>) src(%129 : memref<1x32xf32, #tpu.memory_space<any>>) dst(%130 : memref<1x32xf32, #tpu.memory_space<vmem>>)
    %c5_i32_89 = arith.constant 5 : i32
    %c0_i32_90 = arith.constant 0 : i32
    %c0_i32_91 = arith.constant 0 : i32
    %133 = tpu.memref_slice %arg2[%c0_i32_90, %c0_i32_91] : memref<64x32xf32, #tpu.memory_space<any>> -> memref<1x32xf32, #tpu.memory_space<any>>
    %c5_i32_92 = arith.constant 5 : i32
    %c0_i32_93 = arith.constant 0 : i32
    %134 = tpu.memref_slice %arg4[%c5_i32_92, %c0_i32_93] : memref<16x32xf32, #tpu.memory_space<vmem>> -> memref<1x32xf32, #tpu.memory_space<vmem>>
    %135 = tpu.memref_slice %arg5[%c5_i32_89] : memref<16x!tpu.dma_semaphore, #tpu.memory_space<semaphore_mem>> -> memref<1x!tpu.dma_semaphore, #tpu.memory_space<semaphore_mem>>
    %136 = tpu.memref_squeeze %135 : memref<1x!tpu.dma_semaphore, #tpu.memory_space<semaphore_mem>> -> memref<!tpu.dma_semaphore, #tpu.memory_space<semaphore_mem>>
    tpu.wait_dma2 semaphore(%136 : memref<!tpu.dma_semaphore, #tpu.memory_space<semaphore_mem>>) src(%133 : memref<1x32xf32, #tpu.memory_space<any>>) dst(%134 : memref<1x32xf32, #tpu.memory_space<vmem>>)
    %c6_i32_94 = arith.constant 6 : i32
    %c0_i32_95 = arith.constant 0 : i32
    %c0_i32_96 = arith.constant 0 : i32
    %137 = tpu.memref_slice %arg2[%c0_i32_95, %c0_i32_96] : memref<64x32xf32, #tpu.memory_space<any>> -> memref<1x32xf32, #tpu.memory_space<any>>
    %c6_i32_97 = arith.constant 6 : i32
    %c0_i32_98 = arith.constant 0 : i32
    %138 = tpu.memref_slice %arg4[%c6_i32_97, %c0_i32_98] : memref<16x32xf32, #tpu.memory_space<vmem>> -> memref<1x32xf32, #tpu.memory_space<vmem>>
    %139 = tpu.memref_slice %arg5[%c6_i32_94] : memref<16x!tpu.dma_semaphore, #tpu.memory_space<semaphore_mem>> -> memref<1x!tpu.dma_semaphore, #tpu.memory_space<semaphore_mem>>
    %140 = tpu.memref_squeeze %139 : memref<1x!tpu.dma_semaphore, #tpu.memory_space<semaphore_mem>> -> memref<!tpu.dma_semaphore, #tpu.memory_space<semaphore_mem>>
    tpu.wait_dma2 semaphore(%140 : memref<!tpu.dma_semaphore, #tpu.memory_space<semaphore_mem>>) src(%137 : memref<1x32xf32, #tpu.memory_space<any>>) dst(%138 : memref<1x32xf32, #tpu.memory_space<vmem>>)
    %c7_i32_99 = arith.constant 7 : i32
    %c0_i32_100 = arith.constant 0 : i32
    %c0_i32_101 = arith.constant 0 : i32
    %141 = tpu.memref_slice %arg2[%c0_i32_100, %c0_i32_101] : memref<64x32xf32, #tpu.memory_space<any>> -> memref<1x32xf32, #tpu.memory_space<any>>
    %c7_i32_102 = arith.constant 7 : i32
    %c0_i32_103 = arith.constant 0 : i32
    %142 = tpu.memref_slice %arg4[%c7_i32_102, %c0_i32_103] : memref<16x32xf32, #tpu.memory_space<vmem>> -> memref<1x32xf32, #tpu.memory_space<vmem>>
    %143 = tpu.memref_slice %arg5[%c7_i32_99] : memref<16x!tpu.dma_semaphore, #tpu.memory_space<semaphore_mem>> -> memref<1x!tpu.dma_semaphore, #tpu.memory_space<semaphore_mem>>
    %144 = tpu.memref_squeeze %143 : memref<1x!tpu.dma_semaphore, #tpu.memory_space<semaphore_mem>> -> memref<!tpu.dma_semaphore, #tpu.memory_space<semaphore_mem>>
    tpu.wait_dma2 semaphore(%144 : memref<!tpu.dma_semaphore, #tpu.memory_space<semaphore_mem>>) src(%141 : memref<1x32xf32, #tpu.memory_space<any>>) dst(%142 : memref<1x32xf32, #tpu.memory_space<vmem>>)
    %c8_i32_104 = arith.constant 8 : i32
    %c0_i32_105 = arith.constant 0 : i32
    %c0_i32_106 = arith.constant 0 : i32
    %145 = tpu.memref_slice %arg2[%c0_i32_105, %c0_i32_106] : memref<64x32xf32, #tpu.memory_space<any>> -> memref<1x32xf32, #tpu.memory_space<any>>
    %c8_i32_107 = arith.constant 8 : i32
    %c0_i32_108 = arith.constant 0 : i32
    %146 = tpu.memref_slice %arg4[%c8_i32_107, %c0_i32_108] : memref<16x32xf32, #tpu.memory_space<vmem>> -> memref<1x32xf32, #tpu.memory_space<vmem>>
    %147 = tpu.memref_slice %arg5[%c8_i32_104] : memref<16x!tpu.dma_semaphore, #tpu.memory_space<semaphore_mem>> -> memref<1x!tpu.dma_semaphore, #tpu.memory_space<semaphore_mem>>
    %148 = tpu.memref_squeeze %147 : memref<1x!tpu.dma_semaphore, #tpu.memory_space<semaphore_mem>> -> memref<!tpu.dma_semaphore, #tpu.memory_space<semaphore_mem>>
    tpu.wait_dma2 semaphore(%148 : memref<!tpu.dma_semaphore, #tpu.memory_space<semaphore_mem>>) src(%145 : memref<1x32xf32, #tpu.memory_space<any>>) dst(%146 : memref<1x32xf32, #tpu.memory_space<vmem>>)
    %c9_i32_109 = arith.constant 9 : i32
    %c0_i32_110 = arith.constant 0 : i32
    %c0_i32_111 = arith.constant 0 : i32
    %149 = tpu.memref_slice %arg2[%c0_i32_110, %c0_i32_111] : memref<64x32xf32, #tpu.memory_space<any>> -> memref<1x32xf32, #tpu.memory_space<any>>
    %c9_i32_112 = arith.constant 9 : i32
    %c0_i32_113 = arith.constant 0 : i32
    %150 = tpu.memref_slice %arg4[%c9_i32_112, %c0_i32_113] : memref<16x32xf32, #tpu.memory_space<vmem>> -> memref<1x32xf32, #tpu.memory_space<vmem>>
    %151 = tpu.memref_slice %arg5[%c9_i32_109] : memref<16x!tpu.dma_semaphore, #tpu.memory_space<semaphore_mem>> -> memref<1x!tpu.dma_semaphore, #tpu.memory_space<semaphore_mem>>
    %152 = tpu.memref_squeeze %151 : memref<1x!tpu.dma_semaphore, #tpu.memory_space<semaphore_mem>> -> memref<!tpu.dma_semaphore, #tpu.memory_space<semaphore_mem>>
    tpu.wait_dma2 semaphore(%152 : memref<!tpu.dma_semaphore, #tpu.memory_space<semaphore_mem>>) src(%149 : memref<1x32xf32, #tpu.memory_space<any>>) dst(%150 : memref<1x32xf32, #tpu.memory_space<vmem>>)
    %c10_i32_114 = arith.constant 10 : i32
    %c0_i32_115 = arith.constant 0 : i32
    %c0_i32_116 = arith.constant 0 : i32
    %153 = tpu.memref_slice %arg2[%c0_i32_115, %c0_i32_116] : memref<64x32xf32, #tpu.memory_space<any>> -> memref<1x32xf32, #tpu.memory_space<any>>
    %c10_i32_117 = arith.constant 10 : i32
    %c0_i32_118 = arith.constant 0 : i32
    %154 = tpu.memref_slice %arg4[%c10_i32_117, %c0_i32_118] : memref<16x32xf32, #tpu.memory_space<vmem>> -> memref<1x32xf32, #tpu.memory_space<vmem>>
    %155 = tpu.memref_slice %arg5[%c10_i32_114] : memref<16x!tpu.dma_semaphore, #tpu.memory_space<semaphore_mem>> -> memref<1x!tpu.dma_semaphore, #tpu.memory_space<semaphore_mem>>
    %156 = tpu.memref_squeeze %155 : memref<1x!tpu.dma_semaphore, #tpu.memory_space<semaphore_mem>> -> memref<!tpu.dma_semaphore, #tpu.memory_space<semaphore_mem>>
    tpu.wait_dma2 semaphore(%156 : memref<!tpu.dma_semaphore, #tpu.memory_space<semaphore_mem>>) src(%153 : memref<1x32xf32, #tpu.memory_space<any>>) dst(%154 : memref<1x32xf32, #tpu.memory_space<vmem>>)
    %c11_i32_119 = arith.constant 11 : i32
    %c0_i32_120 = arith.constant 0 : i32
    %c0_i32_121 = arith.constant 0 : i32
    %157 = tpu.memref_slice %arg2[%c0_i32_120, %c0_i32_121] : memref<64x32xf32, #tpu.memory_space<any>> -> memref<1x32xf32, #tpu.memory_space<any>>
    %c11_i32_122 = arith.constant 11 : i32
    %c0_i32_123 = arith.constant 0 : i32
    %158 = tpu.memref_slice %arg4[%c11_i32_122, %c0_i32_123] : memref<16x32xf32, #tpu.memory_space<vmem>> -> memref<1x32xf32, #tpu.memory_space<vmem>>
    %159 = tpu.memref_slice %arg5[%c11_i32_119] : memref<16x!tpu.dma_semaphore, #tpu.memory_space<semaphore_mem>> -> memref<1x!tpu.dma_semaphore, #tpu.memory_space<semaphore_mem>>
    %160 = tpu.memref_squeeze %159 : memref<1x!tpu.dma_semaphore, #tpu.memory_space<semaphore_mem>> -> memref<!tpu.dma_semaphore, #tpu.memory_space<semaphore_mem>>
    tpu.wait_dma2 semaphore(%160 : memref<!tpu.dma_semaphore, #tpu.memory_space<semaphore_mem>>) src(%157 : memref<1x32xf32, #tpu.memory_space<any>>) dst(%158 : memref<1x32xf32, #tpu.memory_space<vmem>>)
    %c12_i32_124 = arith.constant 12 : i32
    %c0_i32_125 = arith.constant 0 : i32
    %c0_i32_126 = arith.constant 0 : i32
    %161 = tpu.memref_slice %arg2[%c0_i32_125, %c0_i32_126] : memref<64x32xf32, #tpu.memory_space<any>> -> memref<1x32xf32, #tpu.memory_space<any>>
    %c12_i32_127 = arith.constant 12 : i32
    %c0_i32_128 = arith.constant 0 : i32
    %162 = tpu.memref_slice %arg4[%c12_i32_127, %c0_i32_128] : memref<16x32xf32, #tpu.memory_space<vmem>> -> memref<1x32xf32, #tpu.memory_space<vmem>>
    %163 = tpu.memref_slice %arg5[%c12_i32_124] : memref<16x!tpu.dma_semaphore, #tpu.memory_space<semaphore_mem>> -> memref<1x!tpu.dma_semaphore, #tpu.memory_space<semaphore_mem>>
    %164 = tpu.memref_squeeze %163 : memref<1x!tpu.dma_semaphore, #tpu.memory_space<semaphore_mem>> -> memref<!tpu.dma_semaphore, #tpu.memory_space<semaphore_mem>>
    tpu.wait_dma2 semaphore(%164 : memref<!tpu.dma_semaphore, #tpu.memory_space<semaphore_mem>>) src(%161 : memref<1x32xf32, #tpu.memory_space<any>>) dst(%162 : memref<1x32xf32, #tpu.memory_space<vmem>>)
    %c13_i32_129 = arith.constant 13 : i32
    %c0_i32_130 = arith.constant 0 : i32
    %c0_i32_131 = arith.constant 0 : i32
    %165 = tpu.memref_slice %arg2[%c0_i32_130, %c0_i32_131] : memref<64x32xf32, #tpu.memory_space<any>> -> memref<1x32xf32, #tpu.memory_space<any>>
    %c13_i32_132 = arith.constant 13 : i32
    %c0_i32_133 = arith.constant 0 : i32
    %166 = tpu.memref_slice %arg4[%c13_i32_132, %c0_i32_133] : memref<16x32xf32, #tpu.memory_space<vmem>> -> memref<1x32xf32, #tpu.memory_space<vmem>>
    %167 = tpu.memref_slice %arg5[%c13_i32_129] : memref<16x!tpu.dma_semaphore, #tpu.memory_space<semaphore_mem>> -> memref<1x!tpu.dma_semaphore, #tpu.memory_space<semaphore_mem>>
    %168 = tpu.memref_squeeze %167 : memref<1x!tpu.dma_semaphore, #tpu.memory_space<semaphore_mem>> -> memref<!tpu.dma_semaphore, #tpu.memory_space<semaphore_mem>>
    tpu.wait_dma2 semaphore(%168 : memref<!tpu.dma_semaphore, #tpu.memory_space<semaphore_mem>>) src(%165 : memref<1x32xf32, #tpu.memory_space<any>>) dst(%166 : memref<1x32xf32, #tpu.memory_space<vmem>>)
    %c14_i32_134 = arith.constant 14 : i32
    %c0_i32_135 = arith.constant 0 : i32
    %c0_i32_136 = arith.constant 0 : i32
    %169 = tpu.memref_slice %arg2[%c0_i32_135, %c0_i32_136] : memref<64x32xf32, #tpu.memory_space<any>> -> memref<1x32xf32, #tpu.memory_space<any>>
    %c14_i32_137 = arith.constant 14 : i32
    %c0_i32_138 = arith.constant 0 : i32
    %170 = tpu.memref_slice %arg4[%c14_i32_137, %c0_i32_138] : memref<16x32xf32, #tpu.memory_space<vmem>> -> memref<1x32xf32, #tpu.memory_space<vmem>>
    %171 = tpu.memref_slice %arg5[%c14_i32_134] : memref<16x!tpu.dma_semaphore, #tpu.memory_space<semaphore_mem>> -> memref<1x!tpu.dma_semaphore, #tpu.memory_space<semaphore_mem>>
    %172 = tpu.memref_squeeze %171 : memref<1x!tpu.dma_semaphore, #tpu.memory_space<semaphore_mem>> -> memref<!tpu.dma_semaphore, #tpu.memory_space<semaphore_mem>>
    tpu.wait_dma2 semaphore(%172 : memref<!tpu.dma_semaphore, #tpu.memory_space<semaphore_mem>>) src(%169 : memref<1x32xf32, #tpu.memory_space<any>>) dst(%170 : memref<1x32xf32, #tpu.memory_space<vmem>>)
    %c15_i32_139 = arith.constant 15 : i32
    %c0_i32_140 = arith.constant 0 : i32
    %c0_i32_141 = arith.constant 0 : i32
    %173 = tpu.memref_slice %arg2[%c0_i32_140, %c0_i32_141] : memref<64x32xf32, #tpu.memory_space<any>> -> memref<1x32xf32, #tpu.memory_space<any>>
    %c15_i32_142 = arith.constant 15 : i32
    %c0_i32_143 = arith.constant 0 : i32
    %174 = tpu.memref_slice %arg4[%c15_i32_142, %c0_i32_143] : memref<16x32xf32, #tpu.memory_space<vmem>> -> memref<1x32xf32, #tpu.memory_space<vmem>>
    %175 = tpu.memref_slice %arg5[%c15_i32_139] : memref<16x!tpu.dma_semaphore, #tpu.memory_space<semaphore_mem>> -> memref<1x!tpu.dma_semaphore, #tpu.memory_space<semaphore_mem>>
    %176 = tpu.memref_squeeze %175 : memref<1x!tpu.dma_semaphore, #tpu.memory_space<semaphore_mem>> -> memref<!tpu.dma_semaphore, #tpu.memory_space<semaphore_mem>>
    tpu.wait_dma2 semaphore(%176 : memref<!tpu.dma_semaphore, #tpu.memory_space<semaphore_mem>>) src(%173 : memref<1x32xf32, #tpu.memory_space<any>>) dst(%174 : memref<1x32xf32, #tpu.memory_space<vmem>>)
    %c0 = arith.constant 0 : index
    %c0_144 = arith.constant 0 : index
    %177 = vector.load %arg4[%c0, %c0_144] : memref<16x32xf32, #tpu.memory_space<vmem>>, vector<16x32xf32>
    %cst = arith.constant 5.65685415 : f32
    %178 = vector.broadcast %cst : f32 to vector<16x32xf32>
    %179 = arith.mulf %177, %178 : vector<16x32xf32>
    %c0_145 = arith.constant 0 : index
    %c0_146 = arith.constant 0 : index
    %180 = vector.load %arg3[%c0_145, %c0_146] : memref<16x32xf32, #tpu.memory_space<vmem>>, vector<16x32xf32>
    tpu.vector_store %arg3[%c0_145, %c0_146], %179 {strides = array<i32>} : memref<16x32xf32, #tpu.memory_space<vmem>>, vector<16x32xf32>,
    return
  }
  func.func @transform_1(%arg0: i32, %arg1: memref<16xi32, #tpu.memory_space<smem>>) -> (i32, i32) {
    %c0_i32 = arith.constant 0 : i32
    %c0_i32_0 = arith.constant 0 : i32
    return %arg0, %c0_i32 : i32, i32
  }
}

</mosaic_0001>

<llo_original>
// kernel: tpu_custom_call.1
$region0: #{tpu_custom_call.1}
  #allocation0 [shape = 'u32[]', space=smem, size = 0x4, offset = 0x4, fixed_abs, tag = 'smem constant byte address 0x4 - core index']
  #allocation1 [shape = 'u32[144,128]{1,0:T(1,128)}', space=vmem, size = 0x12000, scoped, tag = 'internal scratch']
  #allocation2 [shape = 'f32[16,32]{1,0:T(8,128)}', space=vmem, size = 0x2000, scoped, tag = 'scratch operand']
  #allocation3 [shape = 's32[16]{0}', space=sflag, size = 0x40, scoped, tag = 'scratch operand']
  #allocation4 [shape = 's32[1]{0}', space=sflag, size = 0x4, scoped, tag = 'scoped memory for tpu_custom_call.1']
  #allocation5 [shape = 'u8[512]{0}', space=smem, size = 0x200, scoped, tag = 'prefetched SMEM operand 0']
  #allocation8 [shape = 's32[]', space=sflag, size = 0x4, offset = 0, fixed_abs, tag = 'sflag constant byte address 0x0 - dummy sync flag']
  #allocation9 [shape = 's32[]', space=sflag, size = 0x4, offset = 0, fixed_abs, tag = 'sflag constant byte address 0x0 - dummy sync flag']
  #allocation10 [shape = 's32[]', space=sflag, size = 0x4, offset = 0, fixed_abs, tag = 'sflag constant byte address 0x0 - dummy sync flag']
  #allocation11 [shape = 's32[]', space=sflag, size = 0x4, offset = 0, fixed_abs, tag = 'sflag constant byte address 0x0 - dummy sync flag']
  #allocation12 [shape = 's32[]', space=sflag, size = 0x4, offset = 0, fixed_abs, tag = 'sflag constant byte address 0x0 - dummy sync flag']
  #allocation13 [shape = 's32[]', space=sflag, size = 0x4, offset = 0, fixed_abs, tag = 'sflag constant byte address 0x0 - dummy sync flag']
  #allocation14 [shape = 's32[]', space=sflag, size = 0x4, offset = 0, fixed_abs, tag = 'sflag constant byte address 0x0 - dummy sync flag']
  #allocation15 [shape = 's32[]', space=sflag, size = 0x4, offset = 0, fixed_abs, tag = 'sflag constant byte address 0x0 - dummy sync flag']
  #allocation16 [shape = 's32[]', space=sflag, size = 0x4, offset = 0, fixed_abs, tag = 'sflag constant byte address 0x0 - dummy sync flag']
  #allocation17 [shape = 's32[]', space=sflag, size = 0x4, offset = 0, fixed_abs, tag = 'sflag constant byte address 0x0 - dummy sync flag']
  #allocation18 [shape = 's32[]', space=sflag, size = 0x4, offset = 0, fixed_abs, tag = 'sflag constant byte address 0x0 - dummy sync flag']
  #allocation19 [shape = 's32[]', space=sflag, size = 0x4, offset = 0, fixed_abs, tag = 'sflag constant byte address 0x0 - dummy sync flag']
  #allocation20 [shape = 's32[]', space=sflag, size = 0x4, offset = 0, fixed_abs, tag = 'sflag constant byte address 0x0 - dummy sync flag']
  #allocation21 [shape = 's32[]', space=sflag, size = 0x4, offset = 0, fixed_abs, tag = 'sflag constant byte address 0x0 - dummy sync flag']
  #allocation22 [shape = 's32[]', space=sflag, size = 0x4, offset = 0, fixed_abs, tag = 'sflag constant byte address 0x0 - dummy sync flag']
  #allocation23 [shape = 's32[]', space=sflag, size = 0x4, offset = 0, fixed_abs, tag = 'sflag constant byte address 0x0 - dummy sync flag']
  %s0 = inlined_call_operand.vmem [shape: s32[16], index: 0, kind: input, shape index: {}]
  %s1 = inlined_call_operand.vmem [shape: f32[64,32], index: 1, kind: input, shape index: {}]
  %s2 = inlined_call_operand.hbm [shape: f32[16,32], index: 2, kind: output, shape index: {}]
  %s3 = sld [smem:[#allocation0]]
  $region490: #{tpu_custom_call.1} parent=0
    _
  %s5 = ssub.s32 1, %s3
  %s6 = scalar_select 0, %s5, %s3
  %s7 = sshll.u32 %s0, 4
  %s8 = int_to_ptr.vmem [resolvable:$true] %s7
  %10 = dma.vmem_to_smem %s8, 16, [#allocation5], [#allocation4]
  %11 = dma.done [#allocation4], 16
  %12 = sfence
  $region1: #{tpu_custom_call.1} parent=0
    #allocation6 [shape = 'u8[8192]{0}', space=vmem, size = 0x2000, scoped, tag = 'output window, operand 0, single buffered']
    #allocation7 [shape = 's32[1]{0}', space=sflag, size = 0x4, scoped, tag = 'scoped memory for tpu_custom_call.1']
    %13 = vsyncpa [#allocation7], 0
    %s14 = smul.u32 0, 16
    %s15 = sld [smem:[#allocation5 + %s14]]
    %s16 = scalar_lea.vmem %s1, %s15
    %p18 = scmp.lt.u32.totalorder 1, 8
    %p19 = pneg %p18
    // Predicated region
    $region2: #{tpu_custom_call.1} parent=1 // pred_check
      _
    $region3: #{tpu_custom_call.1} parent=1 // pred_check_branch
      %21 = sbr.rel (%p18) target = $region5
    $region4: #{tpu_custom_call.1} parent=1 // pred_region
      %s36 = sand.u32 1, 7
      %p37 = scmp.eq.s32.totalorder %s36, 0
      %p38 = pneg %p37
      // Predicated region
      $region17: #{tpu_custom_call.1} parent=4 // pred_check
        _
      $region18: #{tpu_custom_call.1} parent=4 // pred_check_branch
        %40 = sbr.rel (%p37) target = $region20
      $region19: #{tpu_custom_call.1} parent=4 // pred_region
        %s41 = sand.u32 1, 7
        %s42 = ssub.s32 1, %s41
        %s43 = scalar_lea.vmem %s16, %s42
        %s44 = ssub.s32 1, %s41
        %s45 = scalar_lea.vmem [#allocation2], %s44
        %s46 = sshllo.u32 0, %s41
        loop: start=0, step=1, limit=1
        $region21: #{tpu_custom_call.1} parent=19 // loop_pre_header
          _
        $region22: #{tpu_custom_call.1} parent=19 // loop_header
          %s48 = sphi 0, %s52
          %p49 = scmp.ge.s32.totalorder %s48, 1
          %s53 = sphi %s43, %s43
          %s54 = sphi %s45, %s45
        $region23: #{tpu_custom_call.1} parent=19 // loop_header_branch
          %51 = sbr.rel (%p49) target = $region27
        $region24: #{tpu_custom_call.1} parent=19 // loop_body
          %v55 = vld [vmem:[%s53] sm:%s46]
          %56 = vst [vmem:[%s54] sm:%s46] %v55
        $region25: #{tpu_custom_call.1} parent=19 // loop_footer
          %s52 = sadd.s32 1, %s48
        $region26: #{tpu_custom_call.1} parent=19 // loop_footer_branch
          %47 = sbr.rel target = $region22
        $region27: #{tpu_custom_call.1} parent=19 // loop_exit
          _
      $region20: #{tpu_custom_call.1} parent=4 // pred_fallthru
        _
    $region5: #{tpu_custom_call.1} parent=1 // pred_fallthru
      _
    // Predicated region
    $region6: #{tpu_custom_call.1} parent=1 // pred_check
      %p22 = pneg %p18
    $region7: #{tpu_custom_call.1} parent=1 // pred_check_branch
      %24 = sbr.rel (%p22) target = $region9
    $region8: #{tpu_custom_call.1} parent=1 // pred_region
      %s25 = sshllo.u32 0, 1
      loop: start=0, step=1, limit=1
      $region10: #{tpu_custom_call.1} parent=8 // loop_pre_header
        _
      $region11: #{tpu_custom_call.1} parent=8 // loop_header
        %s27 = sphi 0, %s31
        %p28 = scmp.ge.s32.totalorder %s27, 1
        %s32 = sphi %s16, %s16
        %s33 = sphi [#allocation2], [#allocation2]
      $region12: #{tpu_custom_call.1} parent=8 // loop_header_branch
        %30 = sbr.rel (%p28) target = $region16
      $region13: #{tpu_custom_call.1} parent=8 // loop_body
        %v34 = vld [vmem:[%s32] sm:%s25]
        %35 = vst [vmem:[%s33] sm:%s25] %v34
      $region14: #{tpu_custom_call.1} parent=8 // loop_footer
        %s31 = sadd.s32 1, %s27
      $region15: #{tpu_custom_call.1} parent=8 // loop_footer_branch
        %26 = sbr.rel target = $region11
      $region16: #{tpu_custom_call.1} parent=8 // loop_exit
        _
    $region9: #{tpu_custom_call.1} parent=1 // pred_fallthru
      _
    // Predicated region
    $region28: #{tpu_custom_call.1} parent=1 // pred_check
      _
    $region29: #{tpu_custom_call.1} parent=1 // pred_check_branch
      %59 = sbr.rel (0) target = $region31
    $region30: #{tpu_custom_call.1} parent=1 // pred_region
      %60 = vsyncadd [#allocation3], 16
    $region31: #{tpu_custom_call.1} parent=1 // pred_fallthru
      _
    %s61 = sadd.s32 %s14, 1
    %s62 = sld [smem:[#allocation5 + %s61]]
    %s63 = scalar_lea.vmem %s1, %s62
    %s64 = scalar_lea.vmem [#allocation2], 1
    %s65 = scalar_lea.sflag [#allocation3], 1
    %p67 = scmp.lt.u32.totalorder 1, 8
    %p68 = pneg %p67
    // Predicated region
    $region32: #{tpu_custom_call.1} parent=1 // pred_check
      _
    $region33: #{tpu_custom_call.1} parent=1 // pred_check_branch
      %70 = sbr.rel (%p67) target = $region35
    $region34: #{tpu_custom_call.1} parent=1 // pred_region
      %s85 = sand.u32 1, 7
      %p86 = scmp.eq.s32.totalorder %s85, 0
      %p87 = pneg %p86
      // Predicated region
      $region47: #{tpu_custom_call.1} parent=34 // pred_check
        _
      $region48: #{tpu_custom_call.1} parent=34 // pred_check_branch
        %89 = sbr.rel (%p86) target = $region50
      $region49: #{tpu_custom_call.1} parent=34 // pred_region
        %s90 = sand.u32 1, 7
        %s91 = ssub.s32 1, %s90
        %s92 = scalar_lea.vmem %s63, %s91
        %s93 = ssub.s32 1, %s90
        %s94 = scalar_lea.vmem %s64, %s93 [#allocation2]
        %s95 = sshllo.u32 0, %s90
        loop: start=0, step=1, limit=1
        $region51: #{tpu_custom_call.1} parent=49 // loop_pre_header
          _
        $region52: #{tpu_custom_call.1} parent=49 // loop_header
          %s97 = sphi 0, %s101
          %p98 = scmp.ge.s32.totalorder %s97, 1
          %s102 = sphi %s92, %s92
          %s103 = sphi %s94, %s94
        $region53: #{tpu_custom_call.1} parent=49 // loop_header_branch
          %100 = sbr.rel (%p98) target = $region57
        $region54: #{tpu_custom_call.1} parent=49 // loop_body
          %v104 = vld [vmem:[%s102] sm:%s95]
          %105 = vst [vmem:[%s103] sm:%s95] %v104
        $region55: #{tpu_custom_call.1} parent=49 // loop_footer
          %s101 = sadd.s32 1, %s97
        $region56: #{tpu_custom_call.1} parent=49 // loop_footer_branch
          %96 = sbr.rel target = $region52
        $region57: #{tpu_custom_call.1} parent=49 // loop_exit
          _
      $region50: #{tpu_custom_call.1} parent=34 // pred_fallthru
        _
    $region35: #{tpu_custom_call.1} parent=1 // pred_fallthru
      _
    // Predicated region
    $region36: #{tpu_custom_call.1} parent=1 // pred_check
      %p71 = pneg %p67
    $region37: #{tpu_custom_call.1} parent=1 // pred_check_branch
      %73 = sbr.rel (%p71) target = $region39
    $region38: #{tpu_custom_call.1} parent=1 // pred_region
      %s74 = sshllo.u32 0, 1
      loop: start=0, step=1, limit=1
      $region40: #{tpu_custom_call.1} parent=38 // loop_pre_header
        _
      $region41: #{tpu_custom_call.1} parent=38 // loop_header
        %s76 = sphi 0, %s80
        %p77 = scmp.ge.s32.totalorder %s76, 1
        %s81 = sphi %s63, %s63
        %s82 = sphi %s64, %s64
      $region42: #{tpu_custom_call.1} parent=38 // loop_header_branch
        %79 = sbr.rel (%p77) target = $region46
      $region43: #{tpu_custom_call.1} parent=38 // loop_body
        %v83 = vld [vmem:[%s81] sm:%s74]
        %84 = vst [vmem:[%s82] sm:%s74] %v83
      $region44: #{tpu_custom_call.1} parent=38 // loop_footer
        %s80 = sadd.s32 1, %s76
      $region45: #{tpu_custom_call.1} parent=38 // loop_footer_branch
        %75 = sbr.rel target = $region41
      $region46: #{tpu_custom_call.1} parent=38 // loop_exit
        _
    $region39: #{tpu_custom_call.1} parent=1 // pred_fallthru
      _
    // Predicated region
    $region58: #{tpu_custom_call.1} parent=1 // pred_check
      _
    $region59: #{tpu_custom_call.1} parent=1 // pred_check_branch
      %108 = sbr.rel (0) target = $region61
    $region60: #{tpu_custom_call.1} parent=1 // pred_region
      %109 = vsyncadd %s65, 16
    $region61: #{tpu_custom_call.1} parent=1 // pred_fallthru
      _
    %s110 = sadd.s32 %s14, 2
    %s111 = sld [smem:[#allocation5 + %s110]]
    %s112 = scalar_lea.vmem %s1, %s111
    %s113 = scalar_lea.vmem [#allocation2], 2
    %s114 = scalar_lea.sflag [#allocation3], 2
    %p116 = scmp.lt.u32.totalorder 1, 8
    %p117 = pneg %p116
    // Predicated region
    $region62: #{tpu_custom_call.1} parent=1 // pred_check
      _
    $region63: #{tpu_custom_call.1} parent=1 // pred_check_branch
      %119 = sbr.rel (%p116) target = $region65
    $region64: #{tpu_custom_call.1} parent=1 // pred_region
      %s134 = sand.u32 1, 7
      %p135 = scmp.eq.s32.totalorder %s134, 0
      %p136 = pneg %p135
      // Predicated region
      $region77: #{tpu_custom_call.1} parent=64 // pred_check
        _
      $region78: #{tpu_custom_call.1} parent=64 // pred_check_branch
        %138 = sbr.rel (%p135) target = $region80
      $region79: #{tpu_custom_call.1} parent=64 // pred_region
        %s139 = sand.u32 1, 7
        %s140 = ssub.s32 1, %s139
        %s141 = scalar_lea.vmem %s112, %s140
        %s142 = ssub.s32 1, %s139
        %s143 = scalar_lea.vmem %s113, %s142 [#allocation2]
        %s144 = sshllo.u32 0, %s139
        loop: start=0, step=1, limit=1
        $region81: #{tpu_custom_call.1} parent=79 // loop_pre_header
          _
        $region82: #{tpu_custom_call.1} parent=79 // loop_header
          %s146 = sphi 0, %s150
          %p147 = scmp.ge.s32.totalorder %s146, 1
          %s151 = sphi %s141, %s141
          %s152 = sphi %s143, %s143
        $region83: #{tpu_custom_call.1} parent=79 // loop_header_branch
          %149 = sbr.rel (%p147) target = $region87
        $region84: #{tpu_custom_call.1} parent=79 // loop_body
          %v153 = vld [vmem:[%s151] sm:%s144]
          %154 = vst [vmem:[%s152] sm:%s144] %v153
        $region85: #{tpu_custom_call.1} parent=79 // loop_footer
          %s150 = sadd.s32 1, %s146
        $region86: #{tpu_custom_call.1} parent=79 // loop_footer_branch
          %145 = sbr.rel target = $region82
        $region87: #{tpu_custom_call.1} parent=79 // loop_exit
          _
      $region80: #{tpu_custom_call.1} parent=64 // pred_fallthru
        _
    $region65: #{tpu_custom_call.1} parent=1 // pred_fallthru
      _
    // Predicated region
    $region66: #{tpu_custom_call.1} parent=1 // pred_check
      %p120 = pneg %p116
    $region67: #{tpu_custom_call.1} parent=1 // pred_check_branch
      %122 = sbr.rel (%p120) target = $region69
    $region68: #{tpu_custom_call.1} parent=1 // pred_region
      %s123 = sshllo.u32 0, 1
      loop: start=0, step=1, limit=1
      $region70: #{tpu_custom_call.1} parent=68 // loop_pre_header
        _
      $region71: #{tpu_custom_call.1} parent=68 // loop_header
        %s125 = sphi 0, %s129
        %p126 = scmp.ge.s32.totalorder %s125, 1
        %s130 = sphi %s112, %s112
        %s131 = sphi %s113, %s113
      $region72: #{tpu_custom_call.1} parent=68 // loop_header_branch
        %128 = sbr.rel (%p126) target = $region76
      $region73: #{tpu_custom_call.1} parent=68 // loop_body
        %v132 = vld [vmem:[%s130] sm:%s123]
        %133 = vst [vmem:[%s131] sm:%s123] %v132
      $region74: #{tpu_custom_call.1} parent=68 // loop_footer
        %s129 = sadd.s32 1, %s125
      $region75: #{tpu_custom_call.1} parent=68 // loop_footer_branch
        %124 = sbr.rel target = $region71
      $region76: #{tpu_custom_call.1} parent=68 // loop_exit
        _
    $region69: #{tpu_custom_call.1} parent=1 // pred_fallthru
      _
    // Predicated region
    $region88: #{tpu_custom_call.1} parent=1 // pred_check
      _
    $region89: #{tpu_custom_call.1} parent=1 // pred_check_branch
      %157 = sbr.rel (0) target = $region91
    $region90: #{tpu_custom_call.1} parent=1 // pred_region
      %158 = vsyncadd %s114, 16
    $region91: #{tpu_custom_call.1} parent=1 // pred_fallthru
      _
    %s159 = sadd.s32 %s14, 3
    %s160 = sld [smem:[#allocation5 + %s159]]
    %s161 = scalar_lea.vmem %s1, %s160
    %s162 = scalar_lea.vmem [#allocation2], 3
    %s163 = scalar_lea.sflag [#allocation3], 3
    %p165 = scmp.lt.u32.totalorder 1, 8
    %p166 = pneg %p165
    // Predicated region
    $region92: #{tpu_custom_call.1} parent=1 // pred_check
      _
    $region93: #{tpu_custom_call.1} parent=1 // pred_check_branch
      %168 = sbr.rel (%p165) target = $region95
    $region94: #{tpu_custom_call.1} parent=1 // pred_region
      %s183 = sand.u32 1, 7
      %p184 = scmp.eq.s32.totalorder %s183, 0
      %p185 = pneg %p184
      // Predicated region
      $region107: #{tpu_custom_call.1} parent=94 // pred_check
        _
      $region108: #{tpu_custom_call.1} parent=94 // pred_check_branch
        %187 = sbr.rel (%p184) target = $region110
      $region109: #{tpu_custom_call.1} parent=94 // pred_region
        %s188 = sand.u32 1, 7
        %s189 = ssub.s32 1, %s188
        %s190 = scalar_lea.vmem %s161, %s189
        %s191 = ssub.s32 1, %s188
        %s192 = scalar_lea.vmem %s162, %s191 [#allocation2]
        %s193 = sshllo.u32 0, %s188
        loop: start=0, step=1, limit=1
        $region111: #{tpu_custom_call.1} parent=109 // loop_pre_header
          _
        $region112: #{tpu_custom_call.1} parent=109 // loop_header
          %s195 = sphi 0, %s199
          %p196 = scmp.ge.s32.totalorder %s195, 1
          %s200 = sphi %s190, %s190
          %s201 = sphi %s192, %s192
        $region113: #{tpu_custom_call.1} parent=109 // loop_header_branch
          %198 = sbr.rel (%p196) target = $region117
        $region114: #{tpu_custom_call.1} parent=109 // loop_body
          %v202 = vld [vmem:[%s200] sm:%s193]
          %203 = vst [vmem:[%s201] sm:%s193] %v202
        $region115: #{tpu_custom_call.1} parent=109 // loop_footer
          %s199 = sadd.s32 1, %s195
        $region116: #{tpu_custom_call.1} parent=109 // loop_footer_branch
          %194 = sbr.rel target = $region112
        $region117: #{tpu_custom_call.1} parent=109 // loop_exit
          _
      $region110: #{tpu_custom_call.1} parent=94 // pred_fallthru
        _
    $region95: #{tpu_custom_call.1} parent=1 // pred_fallthru
      _
    // Predicated region
    $region96: #{tpu_custom_call.1} parent=1 // pred_check
      %p169 = pneg %p165
    $region97: #{tpu_custom_call.1} parent=1 // pred_check_branch
      %171 = sbr.rel (%p169) target = $region99
    $region98: #{tpu_custom_call.1} parent=1 // pred_region
      %s172 = sshllo.u32 0, 1
      loop: start=0, step=1, limit=1
      $region100: #{tpu_custom_call.1} parent=98 // loop_pre_header
        _
      $region101: #{tpu_custom_call.1} parent=98 // loop_header
        %s174 = sphi 0, %s178
        %p175 = scmp.ge.s32.totalorder %s174, 1
        %s179 = sphi %s161, %s161
        %s180 = sphi %s162, %s162
      $region102: #{tpu_custom_call.1} parent=98 // loop_header_branch
        %177 = sbr.rel (%p175) target = $region106
      $region103: #{tpu_custom_call.1} parent=98 // loop_body
        %v181 = vld [vmem:[%s179] sm:%s172]
        %182 = vst [vmem:[%s180] sm:%s172] %v181
      $region104: #{tpu_custom_call.1} parent=98 // loop_footer
        %s178 = sadd.s32 1, %s174
      $region105: #{tpu_custom_call.1} parent=98 // loop_footer_branch
        %173 = sbr.rel target = $region101
      $region106: #{tpu_custom_call.1} parent=98 // loop_exit
        _
    $region99: #{tpu_custom_call.1} parent=1 // pred_fallthru
      _
    // Predicated region
    $region118: #{tpu_custom_call.1} parent=1 // pred_check
      _
    $region119: #{tpu_custom_call.1} parent=1 // pred_check_branch
      %206 = sbr.rel (0) target = $region121
    $region120: #{tpu_custom_call.1} parent=1 // pred_region
      %207 = vsyncadd %s163, 16
    $region121: #{tpu_custom_call.1} parent=1 // pred_fallthru
      _
    %s208 = sadd.s32 %s14, 4
    %s209 = sld [smem:[#allocation5 + %s208]]
    %s210 = scalar_lea.vmem %s1, %s209
    %s211 = scalar_lea.vmem [#allocation2], 4
    %s212 = scalar_lea.sflag [#allocation3], 4
    %p214 = scmp.lt.u32.totalorder 1, 8
    %p215 = pneg %p214
    // Predicated region
    $region122: #{tpu_custom_call.1} parent=1 // pred_check
      _
    $region123: #{tpu_custom_call.1} parent=1 // pred_check_branch
      %217 = sbr.rel (%p214) target = $region125
    $region124: #{tpu_custom_call.1} parent=1 // pred_region
      %s232 = sand.u32 1, 7
      %p233 = scmp.eq.s32.totalorder %s232, 0
      %p234 = pneg %p233
      // Predicated region
      $region137: #{tpu_custom_call.1} parent=124 // pred_check
        _
      $region138: #{tpu_custom_call.1} parent=124 // pred_check_branch
        %236 = sbr.rel (%p233) target = $region140
      $region139: #{tpu_custom_call.1} parent=124 // pred_region
        %s237 = sand.u32 1, 7
        %s238 = ssub.s32 1, %s237
        %s239 = scalar_lea.vmem %s210, %s238
        %s240 = ssub.s32 1, %s237
        %s241 = scalar_lea.vmem %s211, %s240 [#allocation2]
        %s242 = sshllo.u32 0, %s237
        loop: start=0, step=1, limit=1
        $region141: #{tpu_custom_call.1} parent=139 // loop_pre_header
          _
        $region142: #{tpu_custom_call.1} parent=139 // loop_header
          %s244 = sphi 0, %s248
          %p245 = scmp.ge.s32.totalorder %s244, 1
          %s249 = sphi %s239, %s239
          %s250 = sphi %s241, %s241
        $region143: #{tpu_custom_call.1} parent=139 // loop_header_branch
          %247 = sbr.rel (%p245) target = $region147
        $region144: #{tpu_custom_call.1} parent=139 // loop_body
          %v251 = vld [vmem:[%s249] sm:%s242]
          %252 = vst [vmem:[%s250] sm:%s242] %v251
        $region145: #{tpu_custom_call.1} parent=139 // loop_footer
          %s248 = sadd.s32 1, %s244
        $region146: #{tpu_custom_call.1} parent=139 // loop_footer_branch
          %243 = sbr.rel target = $region142
        $region147: #{tpu_custom_call.1} parent=139 // loop_exit
          _
      $region140: #{tpu_custom_call.1} parent=124 // pred_fallthru
        _
    $region125: #{tpu_custom_call.1} parent=1 // pred_fallthru
      _
    // Predicated region
    $region126: #{tpu_custom_call.1} parent=1 // pred_check
      %p218 = pneg %p214
    $region127: #{tpu_custom_call.1} parent=1 // pred_check_branch
      %220 = sbr.rel (%p218) target = $region129
    $region128: #{tpu_custom_call.1} parent=1 // pred_region
      %s221 = sshllo.u32 0, 1
      loop: start=0, step=1, limit=1
      $region130: #{tpu_custom_call.1} parent=128 // loop_pre_header
        _
      $region131: #{tpu_custom_call.1} parent=128 // loop_header
        %s223 = sphi 0, %s227
        %p224 = scmp.ge.s32.totalorder %s223, 1
        %s228 = sphi %s210, %s210
        %s229 = sphi %s211, %s211
      $region132: #{tpu_custom_call.1} parent=128 // loop_header_branch
        %226 = sbr.rel (%p224) target = $region136
      $region133: #{tpu_custom_call.1} parent=128 // loop_body
        %v230 = vld [vmem:[%s228] sm:%s221]
        %231 = vst [vmem:[%s229] sm:%s221] %v230
      $region134: #{tpu_custom_call.1} parent=128 // loop_footer
        %s227 = sadd.s32 1, %s223
      $region135: #{tpu_custom_call.1} parent=128 // loop_footer_branch
        %222 = sbr.rel target = $region131
      $region136: #{tpu_custom_call.1} parent=128 // loop_exit
        _
    $region129: #{tpu_custom_call.1} parent=1 // pred_fallthru
      _
    // Predicated region
    $region148: #{tpu_custom_call.1} parent=1 // pred_check
      _
    $region149: #{tpu_custom_call.1} parent=1 // pred_check_branch
      %255 = sbr.rel (0) target = $region151
    $region150: #{tpu_custom_call.1} parent=1 // pred_region
      %256 = vsyncadd %s212, 16
    $region151: #{tpu_custom_call.1} parent=1 // pred_fallthru
      _
    %s257 = sadd.s32 %s14, 5
    %s258 = sld [smem:[#allocation5 + %s257]]
    %s259 = scalar_lea.vmem %s1, %s258
    %s260 = scalar_lea.vmem [#allocation2], 5
    %s261 = scalar_lea.sflag [#allocation3], 5
    %p263 = scmp.lt.u32.totalorder 1, 8
    %p264 = pneg %p263
    // Predicated region
    $region152: #{tpu_custom_call.1} parent=1 // pred_check
      _
    $region153: #{tpu_custom_call.1} parent=1 // pred_check_branch
      %266 = sbr.rel (%p263) target = $region155
    $region154: #{tpu_custom_call.1} parent=1 // pred_region
      %s281 = sand.u32 1, 7
      %p282 = scmp.eq.s32.totalorder %s281, 0
      %p283 = pneg %p282
      // Predicated region
      $region167: #{tpu_custom_call.1} parent=154 // pred_check
        _
      $region168: #{tpu_custom_call.1} parent=154 // pred_check_branch
        %285 = sbr.rel (%p282) target = $region170
      $region169: #{tpu_custom_call.1} parent=154 // pred_region
        %s286 = sand.u32 1, 7
        %s287 = ssub.s32 1, %s286
        %s288 = scalar_lea.vmem %s259, %s287
        %s289 = ssub.s32 1, %s286
        %s290 = scalar_lea.vmem %s260, %s289 [#allocation2]
        %s291 = sshllo.u32 0, %s286
        loop: start=0, step=1, limit=1
        $region171: #{tpu_custom_call.1} parent=169 // loop_pre_header
          _
        $region172: #{tpu_custom_call.1} parent=169 // loop_header
          %s293 = sphi 0, %s297
          %p294 = scmp.ge.s32.totalorder %s293, 1
          %s298 = sphi %s288, %s288
          %s299 = sphi %s290, %s290
        $region173: #{tpu_custom_call.1} parent=169 // loop_header_branch
          %296 = sbr.rel (%p294) target = $region177
        $region174: #{tpu_custom_call.1} parent=169 // loop_body
          %v300 = vld [vmem:[%s298] sm:%s291]
          %301 = vst [vmem:[%s299] sm:%s291] %v300
        $region175: #{tpu_custom_call.1} parent=169 // loop_footer
          %s297 = sadd.s32 1, %s293
        $region176: #{tpu_custom_call.1} parent=169 // loop_footer_branch
          %292 = sbr.rel target = $region172
        $region177: #{tpu_custom_call.1} parent=169 // loop_exit
          _
      $region170: #{tpu_custom_call.1} parent=154 // pred_fallthru
        _
    $region155: #{tpu_custom_call.1} parent=1 // pred_fallthru
      _
    // Predicated region
    $region156: #{tpu_custom_call.1} parent=1 // pred_check
      %p267 = pneg %p263
    $region157: #{tpu_custom_call.1} parent=1 // pred_check_branch
      %269 = sbr.rel (%p267) target = $region159
    $region158: #{tpu_custom_call.1} parent=1 // pred_region
      %s270 = sshllo.u32 0, 1
      loop: start=0, step=1, limit=1
      $region160: #{tpu_custom_call.1} parent=158 // loop_pre_header
        _
      $region161: #{tpu_custom_call.1} parent=158 // loop_header
        %s272 = sphi 0, %s276
        %p273 = scmp.ge.s32.totalorder %s272, 1
        %s277 = sphi %s259, %s259
        %s278 = sphi %s260, %s260
      $region162: #{tpu_custom_call.1} parent=158 // loop_header_branch
        %275 = sbr.rel (%p273) target = $region166
      $region163: #{tpu_custom_call.1} parent=158 // loop_body
        %v279 = vld [vmem:[%s277] sm:%s270]
        %280 = vst [vmem:[%s278] sm:%s270] %v279
      $region164: #{tpu_custom_call.1} parent=158 // loop_footer
        %s276 = sadd.s32 1, %s272
      $region165: #{tpu_custom_call.1} parent=158 // loop_footer_branch
        %271 = sbr.rel target = $region161
      $region166: #{tpu_custom_call.1} parent=158 // loop_exit
        _
    $region159: #{tpu_custom_call.1} parent=1 // pred_fallthru
      _
    // Predicated region
    $region178: #{tpu_custom_call.1} parent=1 // pred_check
      _
    $region179: #{tpu_custom_call.1} parent=1 // pred_check_branch
      %304 = sbr.rel (0) target = $region181
    $region180: #{tpu_custom_call.1} parent=1 // pred_region
      %305 = vsyncadd %s261, 16
    $region181: #{tpu_custom_call.1} parent=1 // pred_fallthru
      _
    %s306 = sadd.s32 %s14, 6
    %s307 = sld [smem:[#allocation5 + %s306]]
    %s308 = scalar_lea.vmem %s1, %s307
    %s309 = scalar_lea.vmem [#allocation2], 6
    %s310 = scalar_lea.sflag [#allocation3], 6
    %p312 = scmp.lt.u32.totalorder 1, 8
    %p313 = pneg %p312
    // Predicated region
    $region182: #{tpu_custom_call.1} parent=1 // pred_check
      _
    $region183: #{tpu_custom_call.1} parent=1 // pred_check_branch
      %315 = sbr.rel (%p312) target = $region185
    $region184: #{tpu_custom_call.1} parent=1 // pred_region
      %s330 = sand.u32 1, 7
      %p331 = scmp.eq.s32.totalorder %s330, 0
      %p332 = pneg %p331
      // Predicated region
      $region197: #{tpu_custom_call.1} parent=184 // pred_check
        _
      $region198: #{tpu_custom_call.1} parent=184 // pred_check_branch
        %334 = sbr.rel (%p331) target = $region200
      $region199: #{tpu_custom_call.1} parent=184 // pred_region
        %s335 = sand.u32 1, 7
        %s336 = ssub.s32 1, %s335
        %s337 = scalar_lea.vmem %s308, %s336
        %s338 = ssub.s32 1, %s335
        %s339 = scalar_lea.vmem %s309, %s338 [#allocation2]
        %s340 = sshllo.u32 0, %s335
        loop: start=0, step=1, limit=1
        $region201: #{tpu_custom_call.1} parent=199 // loop_pre_header
          _
        $region202: #{tpu_custom_call.1} parent=199 // loop_header
          %s342 = sphi 0, %s346
          %p343 = scmp.ge.s32.totalorder %s342, 1
          %s347 = sphi %s337, %s337
          %s348 = sphi %s339, %s339
        $region203: #{tpu_custom_call.1} parent=199 // loop_header_branch
          %345 = sbr.rel (%p343) target = $region207
        $region204: #{tpu_custom_call.1} parent=199 // loop_body
          %v349 = vld [vmem:[%s347] sm:%s340]
          %350 = vst [vmem:[%s348] sm:%s340] %v349
        $region205: #{tpu_custom_call.1} parent=199 // loop_footer
          %s346 = sadd.s32 1, %s342
        $region206: #{tpu_custom_call.1} parent=199 // loop_footer_branch
          %341 = sbr.rel target = $region202
        $region207: #{tpu_custom_call.1} parent=199 // loop_exit
          _
      $region200: #{tpu_custom_call.1} parent=184 // pred_fallthru
        _
    $region185: #{tpu_custom_call.1} parent=1 // pred_fallthru
      _
    // Predicated region
    $region186: #{tpu_custom_call.1} parent=1 // pred_check
      %p316 = pneg %p312
    $region187: #{tpu_custom_call.1} parent=1 // pred_check_branch
      %318 = sbr.rel (%p316) target = $region189
    $region188: #{tpu_custom_call.1} parent=1 // pred_region
      %s319 = sshllo.u32 0, 1
      loop: start=0, step=1, limit=1
      $region190: #{tpu_custom_call.1} parent=188 // loop_pre_header
        _
      $region191: #{tpu_custom_call.1} parent=188 // loop_header
        %s321 = sphi 0, %s325
        %p322 = scmp.ge.s32.totalorder %s321, 1
        %s326 = sphi %s308, %s308
        %s327 = sphi %s309, %s309
      $region192: #{tpu_custom_call.1} parent=188 // loop_header_branch
        %324 = sbr.rel (%p322) target = $region196
      $region193: #{tpu_custom_call.1} parent=188 // loop_body
        %v328 = vld [vmem:[%s326] sm:%s319]
        %329 = vst [vmem:[%s327] sm:%s319] %v328
      $region194: #{tpu_custom_call.1} parent=188 // loop_footer
        %s325 = sadd.s32 1, %s321
      $region195: #{tpu_custom_call.1} parent=188 // loop_footer_branch
        %320 = sbr.rel target = $region191
      $region196: #{tpu_custom_call.1} parent=188 // loop_exit
        _
    $region189: #{tpu_custom_call.1} parent=1 // pred_fallthru
      _
    // Predicated region
    $region208: #{tpu_custom_call.1} parent=1 // pred_check
      _
    $region209: #{tpu_custom_call.1} parent=1 // pred_check_branch
      %353 = sbr.rel (0) target = $region211
    $region210: #{tpu_custom_call.1} parent=1 // pred_region
      %354 = vsyncadd %s310, 16
    $region211: #{tpu_custom_call.1} parent=1 // pred_fallthru
      _
    %s355 = sadd.s32 %s14, 7
    %s356 = sld [smem:[#allocation5 + %s355]]
    %s357 = scalar_lea.vmem %s1, %s356
    %s358 = scalar_lea.vmem [#allocation2], 7
    %s359 = scalar_lea.sflag [#allocation3], 7
    %p361 = scmp.lt.u32.totalorder 1, 8
    %p362 = pneg %p361
    // Predicated region
    $region212: #{tpu_custom_call.1} parent=1 // pred_check
      _
    $region213: #{tpu_custom_call.1} parent=1 // pred_check_branch
      %364 = sbr.rel (%p361) target = $region215
    $region214: #{tpu_custom_call.1} parent=1 // pred_region
      %s379 = sand.u32 1, 7
      %p380 = scmp.eq.s32.totalorder %s379, 0
      %p381 = pneg %p380
      // Predicated region
      $region227: #{tpu_custom_call.1} parent=214 // pred_check
        _
      $region228: #{tpu_custom_call.1} parent=214 // pred_check_branch
        %383 = sbr.rel (%p380) target = $region230
      $region229: #{tpu_custom_call.1} parent=214 // pred_region
        %s384 = sand.u32 1, 7
        %s385 = ssub.s32 1, %s384
        %s386 = scalar_lea.vmem %s357, %s385
        %s387 = ssub.s32 1, %s384
        %s388 = scalar_lea.vmem %s358, %s387 [#allocation2]
        %s389 = sshllo.u32 0, %s384
        loop: start=0, step=1, limit=1
        $region231: #{tpu_custom_call.1} parent=229 // loop_pre_header
          _
        $region232: #{tpu_custom_call.1} parent=229 // loop_header
          %s391 = sphi 0, %s395
          %p392 = scmp.ge.s32.totalorder %s391, 1
          %s396 = sphi %s386, %s386
          %s397 = sphi %s388, %s388
        $region233: #{tpu_custom_call.1} parent=229 // loop_header_branch
          %394 = sbr.rel (%p392) target = $region237
        $region234: #{tpu_custom_call.1} parent=229 // loop_body
          %v398 = vld [vmem:[%s396] sm:%s389]
          %399 = vst [vmem:[%s397] sm:%s389] %v398
        $region235: #{tpu_custom_call.1} parent=229 // loop_footer
          %s395 = sadd.s32 1, %s391
        $region236: #{tpu_custom_call.1} parent=229 // loop_footer_branch
          %390 = sbr.rel target = $region232
        $region237: #{tpu_custom_call.1} parent=229 // loop_exit
          _
      $region230: #{tpu_custom_call.1} parent=214 // pred_fallthru
        _
    $region215: #{tpu_custom_call.1} parent=1 // pred_fallthru
      _
    // Predicated region
    $region216: #{tpu_custom_call.1} parent=1 // pred_check
      %p365 = pneg %p361
    $region217: #{tpu_custom_call.1} parent=1 // pred_check_branch
      %367 = sbr.rel (%p365) target = $region219
    $region218: #{tpu_custom_call.1} parent=1 // pred_region
      %s368 = sshllo.u32 0, 1
      loop: start=0, step=1, limit=1
      $region220: #{tpu_custom_call.1} parent=218 // loop_pre_header
        _
      $region221: #{tpu_custom_call.1} parent=218 // loop_header
        %s370 = sphi 0, %s374
        %p371 = scmp.ge.s32.totalorder %s370, 1
        %s375 = sphi %s357, %s357
        %s376 = sphi %s358, %s358
      $region222: #{tpu_custom_call.1} parent=218 // loop_header_branch
        %373 = sbr.rel (%p371) target = $region226
      $region223: #{tpu_custom_call.1} parent=218 // loop_body
        %v377 = vld [vmem:[%s375] sm:%s368]
        %378 = vst [vmem:[%s376] sm:%s368] %v377
      $region224: #{tpu_custom_call.1} parent=218 // loop_footer
        %s374 = sadd.s32 1, %s370
      $region225: #{tpu_custom_call.1} parent=218 // loop_footer_branch
        %369 = sbr.rel target = $region221
      $region226: #{tpu_custom_call.1} parent=218 // loop_exit
        _
    $region219: #{tpu_custom_call.1} parent=1 // pred_fallthru
      _
    // Predicated region
    $region238: #{tpu_custom_call.1} parent=1 // pred_check
      _
    $region239: #{tpu_custom_call.1} parent=1 // pred_check_branch
      %402 = sbr.rel (0) target = $region241
    $region240: #{tpu_custom_call.1} parent=1 // pred_region
      %403 = vsyncadd %s359, 16
    $region241: #{tpu_custom_call.1} parent=1 // pred_fallthru
      _
    %s404 = sadd.s32 %s14, 8
    %s405 = sld [smem:[#allocation5 + %s404]]
    %s406 = scalar_lea.vmem %s1, %s405
    %s407 = scalar_lea.vmem [#allocation2], 8
    %s408 = scalar_lea.sflag [#allocation3], 8
    %p410 = scmp.lt.u32.totalorder 1, 8
    %p411 = pneg %p410
    // Predicated region
    $region242: #{tpu_custom_call.1} parent=1 // pred_check
      _
    $region243: #{tpu_custom_call.1} parent=1 // pred_check_branch
      %413 = sbr.rel (%p410) target = $region245
    $region244: #{tpu_custom_call.1} parent=1 // pred_region
      %s428 = sand.u32 1, 7
      %p429 = scmp.eq.s32.totalorder %s428, 0
      %p430 = pneg %p429
      // Predicated region
      $region257: #{tpu_custom_call.1} parent=244 // pred_check
        _
      $region258: #{tpu_custom_call.1} parent=244 // pred_check_branch
        %432 = sbr.rel (%p429) target = $region260
      $region259: #{tpu_custom_call.1} parent=244 // pred_region
        %s433 = sand.u32 1, 7
        %s434 = ssub.s32 1, %s433
        %s435 = scalar_lea.vmem %s406, %s434
        %s436 = ssub.s32 1, %s433
        %s437 = scalar_lea.vmem %s407, %s436 [#allocation2]
        %s438 = sshllo.u32 0, %s433
        loop: start=0, step=1, limit=1
        $region261: #{tpu_custom_call.1} parent=259 // loop_pre_header
          _
        $region262: #{tpu_custom_call.1} parent=259 // loop_header
          %s440 = sphi 0, %s444
          %p441 = scmp.ge.s32.totalorder %s440, 1
          %s445 = sphi %s435, %s435
          %s446 = sphi %s437, %s437
        $region263: #{tpu_custom_call.1} parent=259 // loop_header_branch
          %443 = sbr.rel (%p441) target = $region267
        $region264: #{tpu_custom_call.1} parent=259 // loop_body
          %v447 = vld [vmem:[%s445] sm:%s438]
          %448 = vst [vmem:[%s446] sm:%s438] %v447
        $region265: #{tpu_custom_call.1} parent=259 // loop_footer
          %s444 = sadd.s32 1, %s440
        $region266: #{tpu_custom_call.1} parent=259 // loop_footer_branch
          %439 = sbr.rel target = $region262
        $region267: #{tpu_custom_call.1} parent=259 // loop_exit
          _
      $region260: #{tpu_custom_call.1} parent=244 // pred_fallthru
        _
    $region245: #{tpu_custom_call.1} parent=1 // pred_fallthru
      _
    // Predicated region
    $region246: #{tpu_custom_call.1} parent=1 // pred_check
      %p414 = pneg %p410
    $region247: #{tpu_custom_call.1} parent=1 // pred_check_branch
      %416 = sbr.rel (%p414) target = $region249
    $region248: #{tpu_custom_call.1} parent=1 // pred_region
      %s417 = sshllo.u32 0, 1
      loop: start=0, step=1, limit=1
      $region250: #{tpu_custom_call.1} parent=248 // loop_pre_header
        _
      $region251: #{tpu_custom_call.1} parent=248 // loop_header
        %s419 = sphi 0, %s423
        %p420 = scmp.ge.s32.totalorder %s419, 1
        %s424 = sphi %s406, %s406
        %s425 = sphi %s407, %s407
      $region252: #{tpu_custom_call.1} parent=248 // loop_header_branch
        %422 = sbr.rel (%p420) target = $region256
      $region253: #{tpu_custom_call.1} parent=248 // loop_body
        %v426 = vld [vmem:[%s424] sm:%s417]
        %427 = vst [vmem:[%s425] sm:%s417] %v426
      $region254: #{tpu_custom_call.1} parent=248 // loop_footer
        %s423 = sadd.s32 1, %s419
      $region255: #{tpu_custom_call.1} parent=248 // loop_footer_branch
        %418 = sbr.rel target = $region251
      $region256: #{tpu_custom_call.1} parent=248 // loop_exit
        _
    $region249: #{tpu_custom_call.1} parent=1 // pred_fallthru
      _
    // Predicated region
    $region268: #{tpu_custom_call.1} parent=1 // pred_check
      _
    $region269: #{tpu_custom_call.1} parent=1 // pred_check_branch
      %451 = sbr.rel (0) target = $region271
    $region270: #{tpu_custom_call.1} parent=1 // pred_region
      %452 = vsyncadd %s408, 16
    $region271: #{tpu_custom_call.1} parent=1 // pred_fallthru
      _
    %s453 = sadd.s32 %s14, 9
    %s454 = sld [smem:[#allocation5 + %s453]]
    %s455 = scalar_lea.vmem %s1, %s454
    %s456 = scalar_lea.vmem [#allocation2], 9
    %s457 = scalar_lea.sflag [#allocation3], 9
    %p459 = scmp.lt.u32.totalorder 1, 8
    %p460 = pneg %p459
    // Predicated region
    $region272: #{tpu_custom_call.1} parent=1 // pred_check
      _
    $region273: #{tpu_custom_call.1} parent=1 // pred_check_branch
      %462 = sbr.rel (%p459) target = $region275
    $region274: #{tpu_custom_call.1} parent=1 // pred_region
      %s477 = sand.u32 1, 7
      %p478 = scmp.eq.s32.totalorder %s477, 0
      %p479 = pneg %p478
      // Predicated region
      $region287: #{tpu_custom_call.1} parent=274 // pred_check
        _
      $region288: #{tpu_custom_call.1} parent=274 // pred_check_branch
        %481 = sbr.rel (%p478) target = $region290
      $region289: #{tpu_custom_call.1} parent=274 // pred_region
        %s482 = sand.u32 1, 7
        %s483 = ssub.s32 1, %s482
        %s484 = scalar_lea.vmem %s455, %s483
        %s485 = ssub.s32 1, %s482
        %s486 = scalar_lea.vmem %s456, %s485 [#allocation2]
        %s487 = sshllo.u32 0, %s482
        loop: start=0, step=1, limit=1
        $region291: #{tpu_custom_call.1} parent=289 // loop_pre_header
          _
        $region292: #{tpu_custom_call.1} parent=289 // loop_header
          %s489 = sphi 0, %s493
          %p490 = scmp.ge.s32.totalorder %s489, 1
          %s494 = sphi %s484, %s484
          %s495 = sphi %s486, %s486
        $region293: #{tpu_custom_call.1} parent=289 // loop_header_branch
          %492 = sbr.rel (%p490) target = $region297
        $region294: #{tpu_custom_call.1} parent=289 // loop_body
          %v496 = vld [vmem:[%s494] sm:%s487]
          %497 = vst [vmem:[%s495] sm:%s487] %v496
        $region295: #{tpu_custom_call.1} parent=289 // loop_footer
          %s493 = sadd.s32 1, %s489
        $region296: #{tpu_custom_call.1} parent=289 // loop_footer_branch
          %488 = sbr.rel target = $region292
        $region297: #{tpu_custom_call.1} parent=289 // loop_exit
          _
      $region290: #{tpu_custom_call.1} parent=274 // pred_fallthru
        _
    $region275: #{tpu_custom_call.1} parent=1 // pred_fallthru
      _
    // Predicated region
    $region276: #{tpu_custom_call.1} parent=1 // pred_check
      %p463 = pneg %p459
    $region277: #{tpu_custom_call.1} parent=1 // pred_check_branch
      %465 = sbr.rel (%p463) target = $region279
    $region278: #{tpu_custom_call.1} parent=1 // pred_region
      %s466 = sshllo.u32 0, 1
      loop: start=0, step=1, limit=1
      $region280: #{tpu_custom_call.1} parent=278 // loop_pre_header
        _
      $region281: #{tpu_custom_call.1} parent=278 // loop_header
        %s468 = sphi 0, %s472
        %p469 = scmp.ge.s32.totalorder %s468, 1
        %s473 = sphi %s455, %s455
        %s474 = sphi %s456, %s456
      $region282: #{tpu_custom_call.1} parent=278 // loop_header_branch
        %471 = sbr.rel (%p469) target = $region286
      $region283: #{tpu_custom_call.1} parent=278 // loop_body
        %v475 = vld [vmem:[%s473] sm:%s466]
        %476 = vst [vmem:[%s474] sm:%s466] %v475
      $region284: #{tpu_custom_call.1} parent=278 // loop_footer
        %s472 = sadd.s32 1, %s468
      $region285: #{tpu_custom_call.1} parent=278 // loop_footer_branch
        %467 = sbr.rel target = $region281
      $region286: #{tpu_custom_call.1} parent=278 // loop_exit
        _
    $region279: #{tpu_custom_call.1} parent=1 // pred_fallthru
      _
    // Predicated region
    $region298: #{tpu_custom_call.1} parent=1 // pred_check
      _
    $region299: #{tpu_custom_call.1} parent=1 // pred_check_branch
      %500 = sbr.rel (0) target = $region301
    $region300: #{tpu_custom_call.1} parent=1 // pred_region
      %501 = vsyncadd %s457, 16
    $region301: #{tpu_custom_call.1} parent=1 // pred_fallthru
      _
    %s502 = sadd.s32 %s14, 10
    %s503 = sld [smem:[#allocation5 + %s502]]
    %s504 = scalar_lea.vmem %s1, %s503
    %s505 = scalar_lea.vmem [#allocation2], 10
    %s506 = scalar_lea.sflag [#allocation3], 10
    %p508 = scmp.lt.u32.totalorder 1, 8
    %p509 = pneg %p508
    // Predicated region
    $region302: #{tpu_custom_call.1} parent=1 // pred_check
      _
    $region303: #{tpu_custom_call.1} parent=1 // pred_check_branch
      %511 = sbr.rel (%p508) target = $region305
    $region304: #{tpu_custom_call.1} parent=1 // pred_region
      %s526 = sand.u32 1, 7
      %p527 = scmp.eq.s32.totalorder %s526, 0
      %p528 = pneg %p527
      // Predicated region
      $region317: #{tpu_custom_call.1} parent=304 // pred_check
        _
      $region318: #{tpu_custom_call.1} parent=304 // pred_check_branch
        %530 = sbr.rel (%p527) target = $region320
      $region319: #{tpu_custom_call.1} parent=304 // pred_region
        %s531 = sand.u32 1, 7
        %s532 = ssub.s32 1, %s531
        %s533 = scalar_lea.vmem %s504, %s532
        %s534 = ssub.s32 1, %s531
        %s535 = scalar_lea.vmem %s505, %s534 [#allocation2]
        %s536 = sshllo.u32 0, %s531
        loop: start=0, step=1, limit=1
        $region321: #{tpu_custom_call.1} parent=319 // loop_pre_header
          _
        $region322: #{tpu_custom_call.1} parent=319 // loop_header
          %s538 = sphi 0, %s542
          %p539 = scmp.ge.s32.totalorder %s538, 1
          %s543 = sphi %s533, %s533
          %s544 = sphi %s535, %s535
        $region323: #{tpu_custom_call.1} parent=319 // loop_header_branch
          %541 = sbr.rel (%p539) target = $region327
        $region324: #{tpu_custom_call.1} parent=319 // loop_body
          %v545 = vld [vmem:[%s543] sm:%s536]
          %546 = vst [vmem:[%s544] sm:%s536] %v545
        $region325: #{tpu_custom_call.1} parent=319 // loop_footer
          %s542 = sadd.s32 1, %s538
        $region326: #{tpu_custom_call.1} parent=319 // loop_footer_branch
          %537 = sbr.rel target = $region322
        $region327: #{tpu_custom_call.1} parent=319 // loop_exit
          _
      $region320: #{tpu_custom_call.1} parent=304 // pred_fallthru
        _
    $region305: #{tpu_custom_call.1} parent=1 // pred_fallthru
      _
    // Predicated region
    $region306: #{tpu_custom_call.1} parent=1 // pred_check
      %p512 = pneg %p508
    $region307: #{tpu_custom_call.1} parent=1 // pred_check_branch
      %514 = sbr.rel (%p512) target = $region309
    $region308: #{tpu_custom_call.1} parent=1 // pred_region
      %s515 = sshllo.u32 0, 1
      loop: start=0, step=1, limit=1
      $region310: #{tpu_custom_call.1} parent=308 // loop_pre_header
        _
      $region311: #{tpu_custom_call.1} parent=308 // loop_header
        %s517 = sphi 0, %s521
        %p518 = scmp.ge.s32.totalorder %s517, 1
        %s522 = sphi %s504, %s504
        %s523 = sphi %s505, %s505
      $region312: #{tpu_custom_call.1} parent=308 // loop_header_branch
        %520 = sbr.rel (%p518) target = $region316
      $region313: #{tpu_custom_call.1} parent=308 // loop_body
        %v524 = vld [vmem:[%s522] sm:%s515]
        %525 = vst [vmem:[%s523] sm:%s515] %v524
      $region314: #{tpu_custom_call.1} parent=308 // loop_footer
        %s521 = sadd.s32 1, %s517
      $region315: #{tpu_custom_call.1} parent=308 // loop_footer_branch
        %516 = sbr.rel target = $region311
      $region316: #{tpu_custom_call.1} parent=308 // loop_exit
        _
    $region309: #{tpu_custom_call.1} parent=1 // pred_fallthru
      _
    // Predicated region
    $region328: #{tpu_custom_call.1} parent=1 // pred_check
      _
    $region329: #{tpu_custom_call.1} parent=1 // pred_check_branch
      %549 = sbr.rel (0) target = $region331
    $region330: #{tpu_custom_call.1} parent=1 // pred_region
      %550 = vsyncadd %s506, 16
    $region331: #{tpu_custom_call.1} parent=1 // pred_fallthru
      _
    %s551 = sadd.s32 %s14, 11
    %s552 = sld [smem:[#allocation5 + %s551]]
    %s553 = scalar_lea.vmem %s1, %s552
    %s554 = scalar_lea.vmem [#allocation2], 11
    %s555 = scalar_lea.sflag [#allocation3], 11
    %p557 = scmp.lt.u32.totalorder 1, 8
    %p558 = pneg %p557
    // Predicated region
    $region332: #{tpu_custom_call.1} parent=1 // pred_check
      _
    $region333: #{tpu_custom_call.1} parent=1 // pred_check_branch
      %560 = sbr.rel (%p557) target = $region335
    $region334: #{tpu_custom_call.1} parent=1 // pred_region
      %s575 = sand.u32 1, 7
      %p576 = scmp.eq.s32.totalorder %s575, 0
      %p577 = pneg %p576
      // Predicated region
      $region347: #{tpu_custom_call.1} parent=334 // pred_check
        _
      $region348: #{tpu_custom_call.1} parent=334 // pred_check_branch
        %579 = sbr.rel (%p576) target = $region350
      $region349: #{tpu_custom_call.1} parent=334 // pred_region
        %s580 = sand.u32 1, 7
        %s581 = ssub.s32 1, %s580
        %s582 = scalar_lea.vmem %s553, %s581
        %s583 = ssub.s32 1, %s580
        %s584 = scalar_lea.vmem %s554, %s583 [#allocation2]
        %s585 = sshllo.u32 0, %s580
        loop: start=0, step=1, limit=1
        $region351: #{tpu_custom_call.1} parent=349 // loop_pre_header
          _
        $region352: #{tpu_custom_call.1} parent=349 // loop_header
          %s587 = sphi 0, %s591
          %p588 = scmp.ge.s32.totalorder %s587, 1
          %s592 = sphi %s582, %s582
          %s593 = sphi %s584, %s584
        $region353: #{tpu_custom_call.1} parent=349 // loop_header_branch
          %590 = sbr.rel (%p588) target = $region357
        $region354: #{tpu_custom_call.1} parent=349 // loop_body
          %v594 = vld [vmem:[%s592] sm:%s585]
          %595 = vst [vmem:[%s593] sm:%s585] %v594
        $region355: #{tpu_custom_call.1} parent=349 // loop_footer
          %s591 = sadd.s32 1, %s587
        $region356: #{tpu_custom_call.1} parent=349 // loop_footer_branch
          %586 = sbr.rel target = $region352
        $region357: #{tpu_custom_call.1} parent=349 // loop_exit
          _
      $region350: #{tpu_custom_call.1} parent=334 // pred_fallthru
        _
    $region335: #{tpu_custom_call.1} parent=1 // pred_fallthru
      _
    // Predicated region
    $region336: #{tpu_custom_call.1} parent=1 // pred_check
      %p561 = pneg %p557
    $region337: #{tpu_custom_call.1} parent=1 // pred_check_branch
      %563 = sbr.rel (%p561) target = $region339
    $region338: #{tpu_custom_call.1} parent=1 // pred_region
      %s564 = sshllo.u32 0, 1
      loop: start=0, step=1, limit=1
      $region340: #{tpu_custom_call.1} parent=338 // loop_pre_header
        _
      $region341: #{tpu_custom_call.1} parent=338 // loop_header
        %s566 = sphi 0, %s570
        %p567 = scmp.ge.s32.totalorder %s566, 1
        %s571 = sphi %s553, %s553
        %s572 = sphi %s554, %s554
      $region342: #{tpu_custom_call.1} parent=338 // loop_header_branch
        %569 = sbr.rel (%p567) target = $region346
      $region343: #{tpu_custom_call.1} parent=338 // loop_body
        %v573 = vld [vmem:[%s571] sm:%s564]
        %574 = vst [vmem:[%s572] sm:%s564] %v573
      $region344: #{tpu_custom_call.1} parent=338 // loop_footer
        %s570 = sadd.s32 1, %s566
      $region345: #{tpu_custom_call.1} parent=338 // loop_footer_branch
        %565 = sbr.rel target = $region341
      $region346: #{tpu_custom_call.1} parent=338 // loop_exit
        _
    $region339: #{tpu_custom_call.1} parent=1 // pred_fallthru
      _
    // Predicated region
    $region358: #{tpu_custom_call.1} parent=1 // pred_check
      _
    $region359: #{tpu_custom_call.1} parent=1 // pred_check_branch
      %598 = sbr.rel (0) target = $region361
    $region360: #{tpu_custom_call.1} parent=1 // pred_region
      %599 = vsyncadd %s555, 16
    $region361: #{tpu_custom_call.1} parent=1 // pred_fallthru
      _
    %s600 = sadd.s32 %s14, 12
    %s601 = sld [smem:[#allocation5 + %s600]]
    %s602 = scalar_lea.vmem %s1, %s601
    %s603 = scalar_lea.vmem [#allocation2], 12
    %s604 = scalar_lea.sflag [#allocation3], 12
    %p606 = scmp.lt.u32.totalorder 1, 8
    %p607 = pneg %p606
    // Predicated region
    $region362: #{tpu_custom_call.1} parent=1 // pred_check
      _
    $region363: #{tpu_custom_call.1} parent=1 // pred_check_branch
      %609 = sbr.rel (%p606) target = $region365
    $region364: #{tpu_custom_call.1} parent=1 // pred_region
      %s624 = sand.u32 1, 7
      %p625 = scmp.eq.s32.totalorder %s624, 0
      %p626 = pneg %p625
      // Predicated region
      $region377: #{tpu_custom_call.1} parent=364 // pred_check
        _
      $region378: #{tpu_custom_call.1} parent=364 // pred_check_branch
        %628 = sbr.rel (%p625) target = $region380
      $region379: #{tpu_custom_call.1} parent=364 // pred_region
        %s629 = sand.u32 1, 7
        %s630 = ssub.s32 1, %s629
        %s631 = scalar_lea.vmem %s602, %s630
        %s632 = ssub.s32 1, %s629
        %s633 = scalar_lea.vmem %s603, %s632 [#allocation2]
        %s634 = sshllo.u32 0, %s629
        loop: start=0, step=1, limit=1
        $region381: #{tpu_custom_call.1} parent=379 // loop_pre_header
          _
        $region382: #{tpu_custom_call.1} parent=379 // loop_header
          %s636 = sphi 0, %s640
          %p637 = scmp.ge.s32.totalorder %s636, 1
          %s641 = sphi %s631, %s631
          %s642 = sphi %s633, %s633
        $region383: #{tpu_custom_call.1} parent=379 // loop_header_branch
          %639 = sbr.rel (%p637) target = $region387
        $region384: #{tpu_custom_call.1} parent=379 // loop_body
          %v643 = vld [vmem:[%s641] sm:%s634]
          %644 = vst [vmem:[%s642] sm:%s634] %v643
        $region385: #{tpu_custom_call.1} parent=379 // loop_footer
          %s640 = sadd.s32 1, %s636
        $region386: #{tpu_custom_call.1} parent=379 // loop_footer_branch
          %635 = sbr.rel target = $region382
        $region387: #{tpu_custom_call.1} parent=379 // loop_exit
          _
      $region380: #{tpu_custom_call.1} parent=364 // pred_fallthru
        _
    $region365: #{tpu_custom_call.1} parent=1 // pred_fallthru
      _
    // Predicated region
    $region366: #{tpu_custom_call.1} parent=1 // pred_check
      %p610 = pneg %p606
    $region367: #{tpu_custom_call.1} parent=1 // pred_check_branch
      %612 = sbr.rel (%p610) target = $region369
    $region368: #{tpu_custom_call.1} parent=1 // pred_region
      %s613 = sshllo.u32 0, 1
      loop: start=0, step=1, limit=1
      $region370: #{tpu_custom_call.1} parent=368 // loop_pre_header
        _
      $region371: #{tpu_custom_call.1} parent=368 // loop_header
        %s615 = sphi 0, %s619
        %p616 = scmp.ge.s32.totalorder %s615, 1
        %s620 = sphi %s602, %s602
        %s621 = sphi %s603, %s603
      $region372: #{tpu_custom_call.1} parent=368 // loop_header_branch
        %618 = sbr.rel (%p616) target = $region376
      $region373: #{tpu_custom_call.1} parent=368 // loop_body
        %v622 = vld [vmem:[%s620] sm:%s613]
        %623 = vst [vmem:[%s621] sm:%s613] %v622
      $region374: #{tpu_custom_call.1} parent=368 // loop_footer
        %s619 = sadd.s32 1, %s615
      $region375: #{tpu_custom_call.1} parent=368 // loop_footer_branch
        %614 = sbr.rel target = $region371
      $region376: #{tpu_custom_call.1} parent=368 // loop_exit
        _
    $region369: #{tpu_custom_call.1} parent=1 // pred_fallthru
      _
    // Predicated region
    $region388: #{tpu_custom_call.1} parent=1 // pred_check
      _
    $region389: #{tpu_custom_call.1} parent=1 // pred_check_branch
      %647 = sbr.rel (0) target = $region391
    $region390: #{tpu_custom_call.1} parent=1 // pred_region
      %648 = vsyncadd %s604, 16
    $region391: #{tpu_custom_call.1} parent=1 // pred_fallthru
      _
    %s649 = sadd.s32 %s14, 13
    %s650 = sld [smem:[#allocation5 + %s649]]
    %s651 = scalar_lea.vmem %s1, %s650
    %s652 = scalar_lea.vmem [#allocation2], 13
    %s653 = scalar_lea.sflag [#allocation3], 13
    %p655 = scmp.lt.u32.totalorder 1, 8
    %p656 = pneg %p655
    // Predicated region
    $region392: #{tpu_custom_call.1} parent=1 // pred_check
      _
    $region393: #{tpu_custom_call.1} parent=1 // pred_check_branch
      %658 = sbr.rel (%p655) target = $region395
    $region394: #{tpu_custom_call.1} parent=1 // pred_region
      %s673 = sand.u32 1, 7
      %p674 = scmp.eq.s32.totalorder %s673, 0
      %p675 = pneg %p674
      // Predicated region
      $region407: #{tpu_custom_call.1} parent=394 // pred_check
        _
      $region408: #{tpu_custom_call.1} parent=394 // pred_check_branch
        %677 = sbr.rel (%p674) target = $region410
      $region409: #{tpu_custom_call.1} parent=394 // pred_region
        %s678 = sand.u32 1, 7
        %s679 = ssub.s32 1, %s678
        %s680 = scalar_lea.vmem %s651, %s679
        %s681 = ssub.s32 1, %s678
        %s682 = scalar_lea.vmem %s652, %s681 [#allocation2]
        %s683 = sshllo.u32 0, %s678
        loop: start=0, step=1, limit=1
        $region411: #{tpu_custom_call.1} parent=409 // loop_pre_header
          _
        $region412: #{tpu_custom_call.1} parent=409 // loop_header
          %s685 = sphi 0, %s689
          %p686 = scmp.ge.s32.totalorder %s685, 1
          %s690 = sphi %s680, %s680
          %s691 = sphi %s682, %s682
        $region413: #{tpu_custom_call.1} parent=409 // loop_header_branch
          %688 = sbr.rel (%p686) target = $region417
        $region414: #{tpu_custom_call.1} parent=409 // loop_body
          %v692 = vld [vmem:[%s690] sm:%s683]
          %693 = vst [vmem:[%s691] sm:%s683] %v692
        $region415: #{tpu_custom_call.1} parent=409 // loop_footer
          %s689 = sadd.s32 1, %s685
        $region416: #{tpu_custom_call.1} parent=409 // loop_footer_branch
          %684 = sbr.rel target = $region412
        $region417: #{tpu_custom_call.1} parent=409 // loop_exit
          _
      $region410: #{tpu_custom_call.1} parent=394 // pred_fallthru
        _
    $region395: #{tpu_custom_call.1} parent=1 // pred_fallthru
      _
    // Predicated region
    $region396: #{tpu_custom_call.1} parent=1 // pred_check
      %p659 = pneg %p655
    $region397: #{tpu_custom_call.1} parent=1 // pred_check_branch
      %661 = sbr.rel (%p659) target = $region399
    $region398: #{tpu_custom_call.1} parent=1 // pred_region
      %s662 = sshllo.u32 0, 1
      loop: start=0, step=1, limit=1
      $region400: #{tpu_custom_call.1} parent=398 // loop_pre_header
        _
      $region401: #{tpu_custom_call.1} parent=398 // loop_header
        %s664 = sphi 0, %s668
        %p665 = scmp.ge.s32.totalorder %s664, 1
        %s669 = sphi %s651, %s651
        %s670 = sphi %s652, %s652
      $region402: #{tpu_custom_call.1} parent=398 // loop_header_branch
        %667 = sbr.rel (%p665) target = $region406
      $region403: #{tpu_custom_call.1} parent=398 // loop_body
        %v671 = vld [vmem:[%s669] sm:%s662]
        %672 = vst [vmem:[%s670] sm:%s662] %v671
      $region404: #{tpu_custom_call.1} parent=398 // loop_footer
        %s668 = sadd.s32 1, %s664
      $region405: #{tpu_custom_call.1} parent=398 // loop_footer_branch
        %663 = sbr.rel target = $region401
      $region406: #{tpu_custom_call.1} parent=398 // loop_exit
        _
    $region399: #{tpu_custom_call.1} parent=1 // pred_fallthru
      _
    // Predicated region
    $region418: #{tpu_custom_call.1} parent=1 // pred_check
      _
    $region419: #{tpu_custom_call.1} parent=1 // pred_check_branch
      %696 = sbr.rel (0) target = $region421
    $region420: #{tpu_custom_call.1} parent=1 // pred_region
      %697 = vsyncadd %s653, 16
    $region421: #{tpu_custom_call.1} parent=1 // pred_fallthru
      _
    %s698 = sadd.s32 %s14, 14
    %s699 = sld [smem:[#allocation5 + %s698]]
    %s700 = scalar_lea.vmem %s1, %s699
    %s701 = scalar_lea.vmem [#allocation2], 14
    %s702 = scalar_lea.sflag [#allocation3], 14
    %p704 = scmp.lt.u32.totalorder 1, 8
    %p705 = pneg %p704
    // Predicated region
    $region422: #{tpu_custom_call.1} parent=1 // pred_check
      _
    $region423: #{tpu_custom_call.1} parent=1 // pred_check_branch
      %707 = sbr.rel (%p704) target = $region425
    $region424: #{tpu_custom_call.1} parent=1 // pred_region
      %s722 = sand.u32 1, 7
      %p723 = scmp.eq.s32.totalorder %s722, 0
      %p724 = pneg %p723
      // Predicated region
      $region437: #{tpu_custom_call.1} parent=424 // pred_check
        _
      $region438: #{tpu_custom_call.1} parent=424 // pred_check_branch
        %726 = sbr.rel (%p723) target = $region440
      $region439: #{tpu_custom_call.1} parent=424 // pred_region
        %s727 = sand.u32 1, 7
        %s728 = ssub.s32 1, %s727
        %s729 = scalar_lea.vmem %s700, %s728
        %s730 = ssub.s32 1, %s727
        %s731 = scalar_lea.vmem %s701, %s730 [#allocation2]
        %s732 = sshllo.u32 0, %s727
        loop: start=0, step=1, limit=1
        $region441: #{tpu_custom_call.1} parent=439 // loop_pre_header
          _
        $region442: #{tpu_custom_call.1} parent=439 // loop_header
          %s734 = sphi 0, %s738
          %p735 = scmp.ge.s32.totalorder %s734, 1
          %s739 = sphi %s729, %s729
          %s740 = sphi %s731, %s731
        $region443: #{tpu_custom_call.1} parent=439 // loop_header_branch
          %737 = sbr.rel (%p735) target = $region447
        $region444: #{tpu_custom_call.1} parent=439 // loop_body
          %v741 = vld [vmem:[%s739] sm:%s732]
          %742 = vst [vmem:[%s740] sm:%s732] %v741
        $region445: #{tpu_custom_call.1} parent=439 // loop_footer
          %s738 = sadd.s32 1, %s734
        $region446: #{tpu_custom_call.1} parent=439 // loop_footer_branch
          %733 = sbr.rel target = $region442
        $region447: #{tpu_custom_call.1} parent=439 // loop_exit
          _
      $region440: #{tpu_custom_call.1} parent=424 // pred_fallthru
        _
    $region425: #{tpu_custom_call.1} parent=1 // pred_fallthru
      _
    // Predicated region
    $region426: #{tpu_custom_call.1} parent=1 // pred_check
      %p708 = pneg %p704
    $region427: #{tpu_custom_call.1} parent=1 // pred_check_branch
      %710 = sbr.rel (%p708) target = $region429
    $region428: #{tpu_custom_call.1} parent=1 // pred_region
      %s711 = sshllo.u32 0, 1
      loop: start=0, step=1, limit=1
      $region430: #{tpu_custom_call.1} parent=428 // loop_pre_header
        _
      $region431: #{tpu_custom_call.1} parent=428 // loop_header
        %s713 = sphi 0, %s717
        %p714 = scmp.ge.s32.totalorder %s713, 1
        %s718 = sphi %s700, %s700
        %s719 = sphi %s701, %s701
      $region432: #{tpu_custom_call.1} parent=428 // loop_header_branch
        %716 = sbr.rel (%p714) target = $region436
      $region433: #{tpu_custom_call.1} parent=428 // loop_body
        %v720 = vld [vmem:[%s718] sm:%s711]
        %721 = vst [vmem:[%s719] sm:%s711] %v720
      $region434: #{tpu_custom_call.1} parent=428 // loop_footer
        %s717 = sadd.s32 1, %s713
      $region435: #{tpu_custom_call.1} parent=428 // loop_footer_branch
        %712 = sbr.rel target = $region431
      $region436: #{tpu_custom_call.1} parent=428 // loop_exit
        _
    $region429: #{tpu_custom_call.1} parent=1 // pred_fallthru
      _
    // Predicated region
    $region448: #{tpu_custom_call.1} parent=1 // pred_check
      _
    $region449: #{tpu_custom_call.1} parent=1 // pred_check_branch
      %745 = sbr.rel (0) target = $region451
    $region450: #{tpu_custom_call.1} parent=1 // pred_region
      %746 = vsyncadd %s702, 16
    $region451: #{tpu_custom_call.1} parent=1 // pred_fallthru
      _
    %s747 = sadd.s32 %s14, 15
    %s748 = sld [smem:[#allocation5 + %s747]]
    %s749 = scalar_lea.vmem %s1, %s748
    %s750 = scalar_lea.vmem [#allocation2], 15
    %s751 = scalar_lea.sflag [#allocation3], 15
    %p753 = scmp.lt.u32.totalorder 1, 8
    %p754 = pneg %p753
    // Predicated region
    $region452: #{tpu_custom_call.1} parent=1 // pred_check
      _
    $region453: #{tpu_custom_call.1} parent=1 // pred_check_branch
      %756 = sbr.rel (%p753) target = $region455
    $region454: #{tpu_custom_call.1} parent=1 // pred_region
      %s771 = sand.u32 1, 7
      %p772 = scmp.eq.s32.totalorder %s771, 0
      %p773 = pneg %p772
      // Predicated region
      $region467: #{tpu_custom_call.1} parent=454 // pred_check
        _
      $region468: #{tpu_custom_call.1} parent=454 // pred_check_branch
        %775 = sbr.rel (%p772) target = $region470
      $region469: #{tpu_custom_call.1} parent=454 // pred_region
        %s776 = sand.u32 1, 7
        %s777 = ssub.s32 1, %s776
        %s778 = scalar_lea.vmem %s749, %s777
        %s779 = ssub.s32 1, %s776
        %s780 = scalar_lea.vmem %s750, %s779 [#allocation2]
        %s781 = sshllo.u32 0, %s776
        loop: start=0, step=1, limit=1
        $region471: #{tpu_custom_call.1} parent=469 // loop_pre_header
          _
        $region472: #{tpu_custom_call.1} parent=469 // loop_header
          %s783 = sphi 0, %s787
          %p784 = scmp.ge.s32.totalorder %s783, 1
          %s788 = sphi %s778, %s778
          %s789 = sphi %s780, %s780
        $region473: #{tpu_custom_call.1} parent=469 // loop_header_branch
          %786 = sbr.rel (%p784) target = $region477
        $region474: #{tpu_custom_call.1} parent=469 // loop_body
          %v790 = vld [vmem:[%s788] sm:%s781]
          %791 = vst [vmem:[%s789] sm:%s781] %v790
        $region475: #{tpu_custom_call.1} parent=469 // loop_footer
          %s787 = sadd.s32 1, %s783
        $region476: #{tpu_custom_call.1} parent=469 // loop_footer_branch
          %782 = sbr.rel target = $region472
        $region477: #{tpu_custom_call.1} parent=469 // loop_exit
          _
      $region470: #{tpu_custom_call.1} parent=454 // pred_fallthru
        _
    $region455: #{tpu_custom_call.1} parent=1 // pred_fallthru
      _
    // Predicated region
    $region456: #{tpu_custom_call.1} parent=1 // pred_check
      %p757 = pneg %p753
    $region457: #{tpu_custom_call.1} parent=1 // pred_check_branch
      %759 = sbr.rel (%p757) target = $region459
    $region458: #{tpu_custom_call.1} parent=1 // pred_region
      %s760 = sshllo.u32 0, 1
      loop: start=0, step=1, limit=1
      $region460: #{tpu_custom_call.1} parent=458 // loop_pre_header
        _
      $region461: #{tpu_custom_call.1} parent=458 // loop_header
        %s762 = sphi 0, %s766
        %p763 = scmp.ge.s32.totalorder %s762, 1
        %s767 = sphi %s749, %s749
        %s768 = sphi %s750, %s750
      $region462: #{tpu_custom_call.1} parent=458 // loop_header_branch
        %765 = sbr.rel (%p763) target = $region466
      $region463: #{tpu_custom_call.1} parent=458 // loop_body
        %v769 = vld [vmem:[%s767] sm:%s760]
        %770 = vst [vmem:[%s768] sm:%s760] %v769
      $region464: #{tpu_custom_call.1} parent=458 // loop_footer
        %s766 = sadd.s32 1, %s762
      $region465: #{tpu_custom_call.1} parent=458 // loop_footer_branch
        %761 = sbr.rel target = $region461
      $region466: #{tpu_custom_call.1} parent=458 // loop_exit
        _
    $region459: #{tpu_custom_call.1} parent=1 // pred_fallthru
      _
    // Predicated region
    $region478: #{tpu_custom_call.1} parent=1 // pred_check
      _
    $region479: #{tpu_custom_call.1} parent=1 // pred_check_branch
      %794 = sbr.rel (0) target = $region481
    $region480: #{tpu_custom_call.1} parent=1 // pred_region
      %795 = vsyncadd %s751, 16
    $region481: #{tpu_custom_call.1} parent=1 // pred_fallthru
      _
    %s796 = smul.u32 1, 1
    %s797 = sshll.u32 %s796, 4
    %798 = dma.done [#allocation3], %s797
    %s799 = sshll.u32 %s796, 4
    %800 = dma.done %s65, %s799
    %s801 = sshll.u32 %s796, 4
    %802 = dma.done %s114, %s801
    %s803 = sshll.u32 %s796, 4
    %804 = dma.done %s163, %s803
    %s805 = sshll.u32 %s796, 4
    %806 = dma.done %s212, %s805
    %s807 = sshll.u32 %s796, 4
    %808 = dma.done %s261, %s807
    %s809 = sshll.u32 %s796, 4
    %810 = dma.done %s310, %s809
    %s811 = sshll.u32 %s796, 4
    %812 = dma.done %s359, %s811
    %s813 = sshll.u32 %s796, 4
    %814 = dma.done %s408, %s813
    %s815 = sshll.u32 %s796, 4
    %816 = dma.done %s457, %s815
    %s817 = sshll.u32 %s796, 4
    %818 = dma.done %s506, %s817
    %s819 = sshll.u32 %s796, 4
    %820 = dma.done %s555, %s819
    %s821 = sshll.u32 %s796, 4
    %822 = dma.done %s604, %s821
    %s823 = sshll.u32 %s796, 4
    %824 = dma.done %s653, %s823
    %s825 = sshll.u32 %s796, 4
    %826 = dma.done %s702, %s825
    %s827 = sshll.u32 %s796, 4
    %828 = dma.done %s751, %s827
    %v829 = vld [vmem:[#allocation2] sm:$0xff]
    %v830 = vld [vmem:[#allocation2 + $0x8] sm:$0xff]
    %v831 = vmul.f32 %v829, 5.656854
    %v832 = vmul.f32 %v830, 5.656854
    %vm833 = vcmask 261120
    %834 = vst.msk [vmem:[#allocation6] sm:$0xff] %vm833, %v831
    %835 = vst.msk [vmem:[#allocation6 + $0x8] sm:$0xff] %vm833, %v832
    // Predicated region
    $region482: #{tpu_custom_call.1} parent=1 // pred_check
      _
    $region483: #{tpu_custom_call.1} parent=1 // pred_check_branch
      %837 = sbr.rel (0) target = $region485
    $region484: #{tpu_custom_call.1} parent=1 // pred_region
      %s839 = ssub.s32 256, 256
      %840 = vsyncadd [#allocation7], %s839
      %s841 = sshll.u32 [#allocation6], 4
      %s842 = int_to_ptr.vmem [resolvable:$true] %s841
      %847 = dma.vmem_to_hbm [thread:$0]  %s842, 256, %s2, [#allocation7], 128, 128, 8
    $region485: #{tpu_custom_call.1} parent=1 // pred_fallthru
      _
    // Predicated region
    $region486: #{tpu_custom_call.1} parent=1 // pred_check
      _
    $region487: #{tpu_custom_call.1} parent=1 // pred_check_branch
      %849 = sbr.rel (0) target = $region489
    $region488: #{tpu_custom_call.1} parent=1 // pred_region
      %850 = dma.done [#allocation7], 256
    $region489: #{tpu_custom_call.1} parent=1 // pred_fallthru
      _
    %851 = vsyncpa [#allocation7], 1
  %852 = vsyncmov [#allocation3]
  %s853 = vpop.sfrf %852
  %p854 = scmp.eq.s32.totalorder %s853, 0
  %p855 = pneg %p854
  %857 = shalt.err (%p855)
  %s858 = scalar_lea.sflag [#allocation3], 1
  %859 = vsyncmov %s858
  %s860 = vpop.sfrf %859
  %p861 = scmp.eq.s32.totalorder %s860, 0
  %p862 = pneg %p861
  %864 = shalt.err (%p862)
  %s865 = scalar_lea.sflag [#allocation3], 2
  %866 = vsyncmov %s865
  %s867 = vpop.sfrf %866
  %p868 = scmp.eq.s32.totalorder %s867, 0
  %p869 = pneg %p868
  %871 = shalt.err (%p869)
  %s872 = scalar_lea.sflag [#allocation3], 3
  %873 = vsyncmov %s872
  %s874 = vpop.sfrf %873
  %p875 = scmp.eq.s32.totalorder %s874, 0
  %p876 = pneg %p875
  %878 = shalt.err (%p876)
  %s879 = scalar_lea.sflag [#allocation3], 4
  %880 = vsyncmov %s879
  %s881 = vpop.sfrf %880
  %p882 = scmp.eq.s32.totalorder %s881, 0
  %p883 = pneg %p882
  %885 = shalt.err (%p883)
  %s886 = scalar_lea.sflag [#allocation3], 5
  %887 = vsyncmov %s886
  %s888 = vpop.sfrf %887
  %p889 = scmp.eq.s32.totalorder %s888, 0
  %p890 = pneg %p889
  %892 = shalt.err (%p890)
  %s893 = scalar_lea.sflag [#allocation3], 6
  %894 = vsyncmov %s893
  %s895 = vpop.sfrf %894
  %p896 = scmp.eq.s32.totalorder %s895, 0
  %p897 = pneg %p896
  %899 = shalt.err (%p897)
  %s900 = scalar_lea.sflag [#allocation3], 7
  %901 = vsyncmov %s900
  %s902 = vpop.sfrf %901
  %p903 = scmp.eq.s32.totalorder %s902, 0
  %p904 = pneg %p903
  %906 = shalt.err (%p904)
  %s907 = scalar_lea.sflag [#allocation3], 8
  %908 = vsyncmov %s907
  %s909 = vpop.sfrf %908
  %p910 = scmp.eq.s32.totalorder %s909, 0
  %p911 = pneg %p910
  %913 = shalt.err (%p911)
  %s914 = scalar_lea.sflag [#allocation3], 9
  %915 = vsyncmov %s914
  %s916 = vpop.sfrf %915
  %p917 = scmp.eq.s32.totalorder %s916, 0
  %p918 = pneg %p917
  %920 = shalt.err (%p918)
  %s921 = scalar_lea.sflag [#allocation3], 10
  %922 = vsyncmov %s921
  %s923 = vpop.sfrf %922
  %p924 = scmp.eq.s32.totalorder %s923, 0
  %p925 = pneg %p924
  %927 = shalt.err (%p925)
  %s928 = scalar_lea.sflag [#allocation3], 11
  %929 = vsyncmov %s928
  %s930 = vpop.sfrf %929
  %p931 = scmp.eq.s32.totalorder %s930, 0
  %p932 = pneg %p931
  %934 = shalt.err (%p932)
  %s935 = scalar_lea.sflag [#allocation3], 12
  %936 = vsyncmov %s935
  %s937 = vpop.sfrf %936
  %p938 = scmp.eq.s32.totalorder %s937, 0
  %p939 = pneg %p938
  %941 = shalt.err (%p939)
  %s942 = scalar_lea.sflag [#allocation3], 13
  %943 = vsyncmov %s942
  %s944 = vpop.sfrf %943
  %p945 = scmp.eq.s32.totalorder %s944, 0
  %p946 = pneg %p945
  %948 = shalt.err (%p946)
  %s949 = scalar_lea.sflag [#allocation3], 14
  %950 = vsyncmov %s949
  %s951 = vpop.sfrf %950
  %p952 = scmp.eq.s32.totalorder %s951, 0
  %p953 = pneg %p952
  %955 = shalt.err (%p953)
  %s956 = scalar_lea.sflag [#allocation3], 15
  %957 = vsyncmov %s956
  %s958 = vpop.sfrf %957
  %p959 = scmp.eq.s32.totalorder %s958, 0
  %p960 = pneg %p959
  %962 = shalt.err (%p960)

</llo_original>
